<compile_context>
chip_gen: v5e
topology: v5e:2x2
jax: 0.10.0
libtpu: 0.0.40
codegen_flags: <defaults>
</compile_context>

<pallas_src>
import math

import jax
import jax.numpy as jnp
from jax.experimental import pallas as pl
from jax.experimental.pallas import tpu as pltpu


def _pack_lanes(val, rpg):
    """Pack `rpg` row-groups of a (rows, cols) value side-by-side along lanes,
    producing a lane-dense (rows//rpg, rpg*cols) slab. Uses only static
    sublane slices + lane concatenation (cheap, well-supported relayouts)."""
    if rpg is None or rpg == 1:
        return val
    rows, cols = val.shape
    rg = rows // rpg
    return jnp.concatenate([val[j * rg:(j + 1) * rg, :] for j in range(rpg)],
                           axis=-1)


def _slab_rows_per_group(rows, cols, n_tiles):
    """Rows-per-slab-row for lane-dense packing, or None if packing is not
    applicable (cols already lane-dense / does not divide 128 / block-shape
    constraints for multi-tile grids would be violated)."""
    if cols % 128 == 0:
        return None                      # already lane-dense
    if 128 % cols != 0:
        return None
    rpg = 128 // cols
    if rows % rpg != 0:
        return None
    if n_tiles > 1 and (rows // rpg) % 8 != 0:
        return None                      # per-tile block second-minor must be 8k
    return rpg


def _unpack_lanes(slab, n_tiles, rows_per_tile, cols, rpg):
    """Wrapper-side inverse of _pack_lanes (plain JAX, outside the kernel)."""
    if rpg is None or rpg == 1:
        return slab.reshape(n_tiles * rows_per_tile, cols)
    rg = rows_per_tile // rpg
    t = slab.reshape(n_tiles, rg, rpg, cols).transpose(0, 2, 1, 3)
    return t.reshape(n_tiles * rows_per_tile, cols)


def make_cross_attention_kernel(b_tile, T, T_E, C, n_head, mm_dtype,
                                y_rpg, att_rpg):
    hd = C // n_head
    scale = 1.0 / math.sqrt(hd)
    R = b_tile * T

    def kernel(x_ref, enc_ref, wq_ref, bq_ref, wk_ref, bk_ref,
               wv_ref, bv_ref, wp_ref, bp_ref, y_ref, att_ref):
        x = x_ref[...]        # (b_tile*T, C)    mm_dtype
        enc = enc_ref[...]    # (b_tile*T_E, CE) mm_dtype

        # Q/K/V projections: single row-major MXU matmuls over all rows of the
        # batch tile, low-precision operands, f32 accumulation, f32 bias add.
        q = jnp.dot(x, wq_ref[...], preferred_element_type=jnp.float32) + bq_ref[...]
        k = jnp.dot(enc, wk_ref[...], preferred_element_type=jnp.float32) + bk_ref[...]
        v = jnp.dot(enc, wv_ref[...], preferred_element_type=jnp.float32) + bv_ref[...]

        # Rearrange to head-major (b_tile*n_head, rows, hd) so both attention
        # contractions run as single batched matmuls (batch = b_tile*n_head)
        # instead of 2*b_tile*n_head tiny K=hd matmuls. Only leading-dim
        # reshapes, static lane slices and a leading-axis stack are used.
        def to_heads(t2d, rows):
            parts = [t2d[:, h * hd:(h + 1) * hd].reshape(b_tile, rows, hd)
                     for h in range(n_head)]
            t4 = jnp.stack(parts, axis=1)                     # (b, H, rows, hd)
            return t4.reshape(b_tile * n_head, rows, hd).astype(mm_dtype)

        qh = to_heads(q, T)
        kh = to_heads(k, T_E)
        vh = to_heads(v, T_E)

        # Scores + softmax (f32 on the VPU/EUP path).
        s = jnp.einsum("bqd,bkd->bqk", qh, kh,
                       preferred_element_type=jnp.float32) * scale  # (bH,T,T_E)
        s = s - jnp.max(s, axis=-1, keepdims=True)
        p = jnp.exp(s)
        denom = jnp.sum(p, axis=-1, keepdims=True)
        att = p * pl.reciprocal(denom, approx=True)                 # f32

        # att @ v, batched over (batch, head).
        yh = jnp.einsum("bqk,bkd->bqd", att.astype(mm_dtype), vh,
                        preferred_element_type=jnp.float32)         # (bH,T,hd)

        # Concatenate heads along lanes once, then a single K=C projection.
        yh4 = yh.reshape(b_tile, n_head, T, hd)
        y_cat = jnp.concatenate([yh4[:, h] for h in range(n_head)],
                                axis=-1).reshape(R, C)               # (R, C)
        out = jnp.dot(y_cat.astype(mm_dtype), wp_ref[...],
                      preferred_element_type=jnp.float32) + bp_ref[...]

        # Mean attention over heads (reduction over a leading dim).
        att4 = att.reshape(b_tile, n_head, T, T_E)
        att_mean = jnp.mean(att4, axis=1).reshape(R, T_E)

        # Lane-dense stores (row groups packed along lanes; wrapper unpacks).
        y_ref[...] = _pack_lanes(out, y_rpg).astype(y_ref.dtype)
        att_ref[...] = _pack_lanes(att_mean, att_rpg).astype(att_ref.dtype)

    return kernel


def prepare_params(torch_style_params, mm_dtype=jnp.bfloat16):
    """One-time preprocessing (hoisted out of the per-call path): transpose
    PyTorch Linear weights (out,in)->(in,out), cast them to the MXU operand
    dtype (bf16 by default), keep biases f32 reshaped to (1, out)."""
    p = {k: jnp.asarray(v, jnp.float32) for k, v in torch_style_params.items()}
    C = p["wq"].shape[0]
    return dict(
        wq=p["wq"].T.astype(mm_dtype), bq=p["bq"].reshape(1, C),
        wk=p["wk"].T.astype(mm_dtype), bk=p["bk"].reshape(1, C),
        wv=p["wv"].T.astype(mm_dtype), bv=p["bv"].reshape(1, C),
        wp=p["wp"].T.astype(mm_dtype), bp=p["bp"].reshape(1, C),
    )


def cross_attention(x, encoder_output, prep, n_head, *, b_tile=None):
    """x: (B, T, C); encoder_output: (B, T_E, CE); prep = prepare_params(...).
    Returns (y, att): (B, T, C) f32, (B, T, T_E) f32."""
    B, T, C = x.shape
    _, T_E, CE = encoder_output.shape
    assert C % n_head == 0
    mm_dtype = prep["wq"].dtype
    sub = 16 if jnp.dtype(mm_dtype).itemsize == 2 else 8

    if b_tile is None:
        # v7x has 2 TensorCores per chip: split the 'parallel' batch axis
        # across both; v5e/v6e (1 TC): fold the whole batch into one block so
        # the ~0.35us grid-step overhead is paid once.
        n_tc = int(getattr(jax.devices()[0], "num_cores", 1) or 1)
        b_tile = B // 2 if (n_tc >= 2 and B % 2 == 0) else B
    # Partial tiles must respect sublane tiling; otherwise fall back to a
    # single whole-batch block (full-array blocks are always legal).
    if B % b_tile != 0 or (b_tile != B and
                           ((b_tile * T) % sub != 0 or (b_tile * T_E) % sub != 0)):
        b_tile = B
    n_tiles = B // b_tile
    R_t = b_tile * T

    y_rpg = _slab_rows_per_group(R_t, C, n_tiles)
    a_rpg = _slab_rows_per_group(R_t, T_E, n_tiles)

    if y_rpg is None:
        y_shape, y_block = (B * T, C), (R_t, C)
    else:
        y_shape, y_block = (n_tiles * (R_t // y_rpg), 128), (R_t // y_rpg, 128)
    if a_rpg is None:
        a_shape, a_block = (B * T, T_E), (R_t, T_E)
    else:
        a_shape, a_block = (n_tiles * (R_t // a_rpg), 128), (R_t // a_rpg, 128)

    x_flat = x.reshape(B * T, C).astype(mm_dtype)
    enc_flat = encoder_output.reshape(B * T_E, CE).astype(mm_dtype)

    kernel = make_cross_attention_kernel(b_tile, T, T_E, C, n_head, mm_dtype,
                                         y_rpg, a_rpg)

    def build(single_buffer_weights):
        def weight_spec(shape):
            # Weight/bias block indices never change; single-buffering them
            # avoids wasting VMEM on a second pipeline buffer (v7x: 64 MiB).
            if single_buffer_weights:
                return pl.BlockSpec(shape, lambda i: (0,) * len(shape),
                                    pipeline_mode=pl.Buffered(1))
            return pl.BlockSpec(shape, lambda i: (0,) * len(shape))

        return pl.pallas_call(
            kernel,
            out_shape=(jax.ShapeDtypeStruct(y_shape, jnp.float32),
                       jax.ShapeDtypeStruct(a_shape, jnp.float32)),
            grid_spec=pltpu.PrefetchScalarGridSpec(
                num_scalar_prefetch=0,
                grid=(n_tiles,),
                in_specs=[
                    pl.BlockSpec((R_t, C), lambda i: (i, 0)),            # x rows
                    pl.BlockSpec((b_tile * T_E, CE), lambda i: (i, 0)),  # enc rows
                    weight_spec((C, C)), weight_spec((1, C)),            # Wq^T, bq
                    weight_spec((CE, C)), weight_spec((1, C)),           # Wk^T, bk
                    weight_spec((CE, C)), weight_spec((1, C)),           # Wv^T, bv
                    weight_spec((C, C)), weight_spec((1, C)),            # Wp^T, bp
                ],
                out_specs=[
                    pl.BlockSpec(y_block, lambda i: (i, 0)),
                    pl.BlockSpec(a_block, lambda i: (i, 0)),
                ],
            ),
            compiler_params=pltpu.CompilerParams(
                dimension_semantics=("parallel",),
            ),
        )

    args = (x_flat, enc_flat, prep["wq"], prep["bq"], prep["wk"], prep["bk"],
            prep["wv"], prep["bv"], prep["wp"], prep["bp"])
    try:
        y_flat, att_flat = build(True)(*args)
    except Exception:
        # jax version without BlockSpec(pipeline_mode=...): fall back to the
        # default double-buffered weights (correctness unaffected).
        y_flat, att_flat = build(False)(*args)

    y = _unpack_lanes(y_flat, n_tiles, R_t, C, y_rpg).reshape(B, T, C)
    att = _unpack_lanes(att_flat, n_tiles, R_t, T_E, a_rpg).reshape(B, T, T_E)
    return y, att


def reference_cross_attention(x, enc, params, n_head):
    B, T, C = x.shape
    _, T_E, CE = enc.shape
    hd = C // n_head
    q = x @ params["wq"].T + params["bq"]
    k = enc @ params["wk"].T + params["bk"]
    v = enc @ params["wv"].T + params["bv"]
    q = q.reshape(B, T, n_head, hd).transpose(0, 2, 1, 3)
    k = k.reshape(B, T_E, n_head, hd).transpose(0, 2, 1, 3)
    v = v.reshape(B, T_E, n_head, hd).transpose(0, 2, 1, 3)
    att = (q @ k.transpose(0, 1, 3, 2)) * (1.0 / math.sqrt(hd))
    att = jax.nn.softmax(att, axis=-1)
    y = att @ v
    y = y.transpose(0, 2, 1, 3).reshape(B, T, C)
    y = y @ params["wp"].T + params["bp"]
    return y, att.mean(axis=1)


if __name__ == "__main__":
    # Small shapes consistent with the module.
    B, T, T_E = 2, 8, 8
    n_embd, condition_embd, n_head = 32, 16, 4

    key = jax.random.PRNGKey(0)
    ks = jax.random.split(key, 10)

    # Deterministic synthetic parameters (PyTorch Linear convention: (out, in)).
    def init_w(k, out_f, in_f):
        bound = 1.0 / math.sqrt(in_f)
        return jax.random.uniform(k, (out_f, in_f), jnp.float32, -bound, bound)

    def init_b(k, out_f, in_f):
        bound = 1.0 / math.sqrt(in_f)
        return jax.random.uniform(k, (out_f,), jnp.float32, -bound, bound)

    params = {
        "wq": init_w(ks[0], n_embd, n_embd),          "bq": init_b(ks[1], n_embd, n_embd),
        "wk": init_w(ks[2], n_embd, condition_embd),  "bk": init_b(ks[3], n_embd, condition_embd),
        "wv": init_w(ks[4], n_embd, condition_embd),  "bv": init_b(ks[5], n_embd, condition_embd),
        "wp": init_w(ks[6], n_embd, n_embd),          "bp": init_b(ks[7], n_embd, n_embd),
    }

    x = jax.random.normal(ks[8], (B, T, n_embd), jnp.float32)
    enc = jax.random.normal(ks[9], (B, T_E, condition_embd), jnp.float32)

    # One-time weight preprocessing (transpose + bf16 MXU operand cast).
    prep = prepare_params(params)

    y, att = cross_attention(x, enc, prep, n_head)
    y = jax.block_until_ready(y)
    att = jax.block_until_ready(att)

    y_ref, att_ref = reference_cross_attention(x, enc, params, n_head)
    # bf16 MXU operands (f32 accumulation) + EUP approximate reciprocal in the
    # softmax => relaxed tolerance vs the f32 reference.
    assert jnp.allclose(y, y_ref, atol=2e-2, rtol=2e-2), "y mismatch"
    assert jnp.allclose(att, att_ref, atol=2e-2, rtol=2e-2), "att mismatch"

    # TODO(synk): attn_drop / resid_drop are identity here (eval-mode dropout).
    print("KERNEL_OK")
</pallas_src>

<mosaic_0001>
module attributes {stable_mosaic.version = 11 : i64} {
  func.func @kernel(%arg0: i32, %arg1: memref<16x32xbf16, #tpu.memory_space<vmem>>, %arg2: memref<16x16xbf16, #tpu.memory_space<vmem>>, %arg3: memref<32x32xbf16, #tpu.memory_space<vmem>>, %arg4: memref<1x32xf32, #tpu.memory_space<vmem>>, %arg5: memref<16x32xbf16, #tpu.memory_space<vmem>>, %arg6: memref<1x32xf32, #tpu.memory_space<vmem>>, %arg7: memref<16x32xbf16, #tpu.memory_space<vmem>>, %arg8: memref<1x32xf32, #tpu.memory_space<vmem>>, %arg9: memref<32x32xbf16, #tpu.memory_space<vmem>>, %arg10: memref<1x32xf32, #tpu.memory_space<vmem>>, %arg11: memref<4x128xf32, #tpu.memory_space<vmem>>, %arg12: memref<1x128xf32, #tpu.memory_space<vmem>>) attributes {dimension_semantics = [#tpu.dimension_semantics<parallel>], iteration_bounds = array<i64: 1>, scalar_prefetch = 0 : i64, scratch_operands = 0 : i64, tpu.core_type = #tpu.core_type<tc>, window_params = [{transform_indices = @transform_0, window_bounds = array<i64: 16, 32>}, {transform_indices = @transform_1, window_bounds = array<i64: 16, 16>}, {pipeline_mode = #tpu.pipeline_mode<synchronous>, transform_indices = @transform_2, window_bounds = array<i64: 32, 32>}, {pipeline_mode = #tpu.pipeline_mode<synchronous>, transform_indices = @transform_3, window_bounds = array<i64: 1, 32>}, {pipeline_mode = #tpu.pipeline_mode<synchronous>, transform_indices = @transform_4, window_bounds = array<i64: 16, 32>}, {pipeline_mode = #tpu.pipeline_mode<synchronous>, transform_indices = @transform_5, window_bounds = array<i64: 1, 32>}, {pipeline_mode = #tpu.pipeline_mode<synchronous>, transform_indices = @transform_6, window_bounds = array<i64: 16, 32>}, {pipeline_mode = #tpu.pipeline_mode<synchronous>, transform_indices = @transform_7, window_bounds = array<i64: 1, 32>}, {pipeline_mode = #tpu.pipeline_mode<synchronous>, transform_indices = @transform_8, window_bounds = array<i64: 32, 32>}, {pipeline_mode = #tpu.pipeline_mode<synchronous>, transform_indices = @transform_9, window_bounds = array<i64: 1, 32>}, {transform_indices = @transform_10, window_bounds = array<i64: 4, 128>}, {transform_indices = @transform_11, window_bounds = array<i64: 1, 128>}]} {
    %c0 = arith.constant 0 : index
    %c0_0 = arith.constant 0 : index
    %0 = vector.load %arg1[%c0, %c0_0] : memref<16x32xbf16, #tpu.memory_space<vmem>>, vector<16x32xbf16>
    %c0_1 = arith.constant 0 : index
    %c0_2 = arith.constant 0 : index
    %1 = vector.load %arg2[%c0_1, %c0_2] : memref<16x16xbf16, #tpu.memory_space<vmem>>, vector<16x16xbf16>
    %c0_3 = arith.constant 0 : index
    %c0_4 = arith.constant 0 : index
    %2 = vector.load %arg3[%c0_3, %c0_4] : memref<32x32xbf16, #tpu.memory_space<vmem>>, vector<32x32xbf16>
    %cst = arith.constant dense<0.000000e+00> : vector<16x32xf32>
    %3 = tpu.matmul %0, %2, %cst {dimension_numbers = #tpu.dot_dimension_numbers<[1], [0], [0], [1], [0, 0, 1, 1], [], []>} : vector<16x32xbf16>, vector<32x32xbf16>, vector<16x32xf32> -> vector<16x32xf32>
    %c0_5 = arith.constant 0 : index
    %c0_6 = arith.constant 0 : index
    %4 = vector.load %arg4[%c0_5, %c0_6] : memref<1x32xf32, #tpu.memory_space<vmem>>, vector<1x32xf32>
    %5 = vector.broadcast %4 : vector<1x32xf32> to vector<16x32xf32>
    %6 = arith.addf %3, %5 : vector<16x32xf32>
    %c0_7 = arith.constant 0 : index
    %c0_8 = arith.constant 0 : index
    %7 = vector.load %arg5[%c0_7, %c0_8] : memref<16x32xbf16, #tpu.memory_space<vmem>>, vector<16x32xbf16>
    %cst_9 = arith.constant dense<0.000000e+00> : vector<16x32xf32>
    %8 = tpu.matmul %1, %7, %cst_9 {dimension_numbers = #tpu.dot_dimension_numbers<[1], [0], [0], [1], [0, 0, 1, 1], [], []>} : vector<16x16xbf16>, vector<16x32xbf16>, vector<16x32xf32> -> vector<16x32xf32>
    %c0_10 = arith.constant 0 : index
    %c0_11 = arith.constant 0 : index
    %9 = vector.load %arg6[%c0_10, %c0_11] : memref<1x32xf32, #tpu.memory_space<vmem>>, vector<1x32xf32>
    %10 = vector.broadcast %9 : vector<1x32xf32> to vector<16x32xf32>
    %11 = arith.addf %8, %10 : vector<16x32xf32>
    %c0_12 = arith.constant 0 : index
    %c0_13 = arith.constant 0 : index
    %12 = vector.load %arg7[%c0_12, %c0_13] : memref<16x32xbf16, #tpu.memory_space<vmem>>, vector<16x32xbf16>
    %cst_14 = arith.constant dense<0.000000e+00> : vector<16x32xf32>
    %13 = tpu.matmul %1, %12, %cst_14 {dimension_numbers = #tpu.dot_dimension_numbers<[1], [0], [0], [1], [0, 0, 1, 1], [], []>} : vector<16x16xbf16>, vector<16x32xbf16>, vector<16x32xf32> -> vector<16x32xf32>
    %c0_15 = arith.constant 0 : index
    %c0_16 = arith.constant 0 : index
    %14 = vector.load %arg8[%c0_15, %c0_16] : memref<1x32xf32, #tpu.memory_space<vmem>>, vector<1x32xf32>
    %15 = vector.broadcast %14 : vector<1x32xf32> to vector<16x32xf32>
    %16 = arith.addf %13, %15 : vector<16x32xf32>
    %17 = vector.extract_strided_slice %6 {offsets = [0, 0], sizes = [16, 8], strides = [1, 1]} : vector<16x32xf32> to vector<16x8xf32>
    %18 = vector.shape_cast %17 : vector<16x8xf32> to vector<2x8x8xf32>
    %19 = vector.extract_strided_slice %6 {offsets = [0, 8], sizes = [16, 8], strides = [1, 1]} : vector<16x32xf32> to vector<16x8xf32>
    %20 = vector.shape_cast %19 : vector<16x8xf32> to vector<2x8x8xf32>
    %21 = vector.extract_strided_slice %6 {offsets = [0, 16], sizes = [16, 8], strides = [1, 1]} : vector<16x32xf32> to vector<16x8xf32>
    %22 = vector.shape_cast %21 : vector<16x8xf32> to vector<2x8x8xf32>
    %23 = vector.extract_strided_slice %6 {offsets = [0, 24], sizes = [16, 8], strides = [1, 1]} : vector<16x32xf32> to vector<16x8xf32>
    %24 = vector.shape_cast %23 : vector<16x8xf32> to vector<2x8x8xf32>
    %25 = vector.shape_cast %18 : vector<2x8x8xf32> to vector<2x1x8x8xf32>
    %26 = vector.shape_cast %20 : vector<2x8x8xf32> to vector<2x1x8x8xf32>
    %27 = vector.shape_cast %22 : vector<2x8x8xf32> to vector<2x1x8x8xf32>
    %28 = vector.shape_cast %24 : vector<2x8x8xf32> to vector<2x1x8x8xf32>
    %29 = tpu.concatenate %25, %26, %27, %28 in 1 : vector<2x1x8x8xf32>, vector<2x1x8x8xf32>, vector<2x1x8x8xf32>, vector<2x1x8x8xf32> -> vector<2x4x8x8xf32>
    %30 = vector.shape_cast %29 : vector<2x4x8x8xf32> to vector<8x8x8xf32>
    %31 = arith.truncf %30 : vector<8x8x8xf32> to vector<8x8x8xbf16>
    %32 = vector.extract_strided_slice %11 {offsets = [0, 0], sizes = [16, 8], strides = [1, 1]} : vector<16x32xf32> to vector<16x8xf32>
    %33 = vector.shape_cast %32 : vector<16x8xf32> to vector<2x8x8xf32>
    %34 = vector.extract_strided_slice %11 {offsets = [0, 8], sizes = [16, 8], strides = [1, 1]} : vector<16x32xf32> to vector<16x8xf32>
    %35 = vector.shape_cast %34 : vector<16x8xf32> to vector<2x8x8xf32>
    %36 = vector.extract_strided_slice %11 {offsets = [0, 16], sizes = [16, 8], strides = [1, 1]} : vector<16x32xf32> to vector<16x8xf32>
    %37 = vector.shape_cast %36 : vector<16x8xf32> to vector<2x8x8xf32>
    %38 = vector.extract_strided_slice %11 {offsets = [0, 24], sizes = [16, 8], strides = [1, 1]} : vector<16x32xf32> to vector<16x8xf32>
    %39 = vector.shape_cast %38 : vector<16x8xf32> to vector<2x8x8xf32>
    %40 = vector.shape_cast %33 : vector<2x8x8xf32> to vector<2x1x8x8xf32>
    %41 = vector.shape_cast %35 : vector<2x8x8xf32> to vector<2x1x8x8xf32>
    %42 = vector.shape_cast %37 : vector<2x8x8xf32> to vector<2x1x8x8xf32>
    %43 = vector.shape_cast %39 : vector<2x8x8xf32> to vector<2x1x8x8xf32>
    %44 = tpu.concatenate %40, %41, %42, %43 in 1 : vector<2x1x8x8xf32>, vector<2x1x8x8xf32>, vector<2x1x8x8xf32>, vector<2x1x8x8xf32> -> vector<2x4x8x8xf32>
    %45 = vector.shape_cast %44 : vector<2x4x8x8xf32> to vector<8x8x8xf32>
    %46 = arith.truncf %45 : vector<8x8x8xf32> to vector<8x8x8xbf16>
    %47 = vector.extract_strided_slice %16 {offsets = [0, 0], sizes = [16, 8], strides = [1, 1]} : vector<16x32xf32> to vector<16x8xf32>
    %48 = vector.shape_cast %47 : vector<16x8xf32> to vector<2x8x8xf32>
    %49 = vector.extract_strided_slice %16 {offsets = [0, 8], sizes = [16, 8], strides = [1, 1]} : vector<16x32xf32> to vector<16x8xf32>
    %50 = vector.shape_cast %49 : vector<16x8xf32> to vector<2x8x8xf32>
    %51 = vector.extract_strided_slice %16 {offsets = [0, 16], sizes = [16, 8], strides = [1, 1]} : vector<16x32xf32> to vector<16x8xf32>
    %52 = vector.shape_cast %51 : vector<16x8xf32> to vector<2x8x8xf32>
    %53 = vector.extract_strided_slice %16 {offsets = [0, 24], sizes = [16, 8], strides = [1, 1]} : vector<16x32xf32> to vector<16x8xf32>
    %54 = vector.shape_cast %53 : vector<16x8xf32> to vector<2x8x8xf32>
    %55 = vector.shape_cast %48 : vector<2x8x8xf32> to vector<2x1x8x8xf32>
    %56 = vector.shape_cast %50 : vector<2x8x8xf32> to vector<2x1x8x8xf32>
    %57 = vector.shape_cast %52 : vector<2x8x8xf32> to vector<2x1x8x8xf32>
    %58 = vector.shape_cast %54 : vector<2x8x8xf32> to vector<2x1x8x8xf32>
    %59 = tpu.concatenate %55, %56, %57, %58 in 1 : vector<2x1x8x8xf32>, vector<2x1x8x8xf32>, vector<2x1x8x8xf32>, vector<2x1x8x8xf32> -> vector<2x4x8x8xf32>
    %60 = vector.shape_cast %59 : vector<2x4x8x8xf32> to vector<8x8x8xf32>
    %61 = arith.truncf %60 : vector<8x8x8xf32> to vector<8x8x8xbf16>
    "tpu.trace_start"() <{level = 10 : i32, message = "bqd,bkd->bqk"}> : () -> ()
    %cst_17 = arith.constant dense<0.000000e+00> : vector<8x8x8xf32>
    %62 = tpu.matmul %31, %46, %cst_17 {dimension_numbers = #tpu.dot_dimension_numbers<[2], [2], [1], [1], [0, 0, 0, 1, 1, 1], [0], [0]>} : vector<8x8x8xbf16>, vector<8x8x8xbf16>, vector<8x8x8xf32> -> vector<8x8x8xf32>
    "tpu.trace_stop"() : () -> ()
    %cst_18 = arith.constant 0.353553385 : f32
    %63 = vector.broadcast %cst_18 : f32 to vector<8x8x8xf32>
    %64 = arith.mulf %62, %63 : vector<8x8x8xf32>
    %cst_19 = arith.constant dense<0xFF800000> : vector<8x8xf32>
    %65 = vector.multi_reduction <maximumf>, %64, %cst_19 [2] : vector<8x8x8xf32> to vector<8x8xf32>
    %66 = vector.shape_cast %65 : vector<8x8xf32> to vector<8x8x1xf32>
    %67 = vector.broadcast %66 : vector<8x8x1xf32> to vector<8x8x8xf32>
    %68 = arith.subf %64, %67 : vector<8x8x8xf32>
    %69 = math.exp %68 : vector<8x8x8xf32>
    %cst_20 = arith.constant dense<0.000000e+00> : vector<8x8xf32>
    %70 = vector.multi_reduction <add>, %69, %cst_20 [2] : vector<8x8x8xf32> to vector<8x8xf32>
    %71 = vector.shape_cast %70 : vector<8x8xf32> to vector<8x8x1xf32>
    %72 = tpu.reciprocal %71 {approx = true} : vector<8x8x1xf32> -> vector<8x8x1xf32>
    %73 = vector.broadcast %72 : vector<8x8x1xf32> to vector<8x8x8xf32>
    %74 = arith.mulf %69, %73 : vector<8x8x8xf32>
    %75 = arith.truncf %74 : vector<8x8x8xf32> to vector<8x8x8xbf16>
    "tpu.trace_start"() <{level = 10 : i32, message = "bqk,bkd->bqd"}> : () -> ()
    %cst_21 = arith.constant dense<0.000000e+00> : vector<8x8x8xf32>
    %76 = tpu.matmul %75, %61, %cst_21 {dimension_numbers = #tpu.dot_dimension_numbers<[2], [1], [1], [2], [0, 0, 0, 1, 1, 2], [0], [0]>} : vector<8x8x8xbf16>, vector<8x8x8xbf16>, vector<8x8x8xf32> -> vector<8x8x8xf32>
    "tpu.trace_stop"() : () -> ()
    %77 = vector.shape_cast %76 : vector<8x8x8xf32> to vector<2x4x8x8xf32>
    %78 = vector.extract_strided_slice %77 {offsets = [0, 0, 0, 0], sizes = [2, 1, 8, 8], strides = [1, 1, 1, 1]} : vector<2x4x8x8xf32> to vector<2x1x8x8xf32>
    %79 = vector.shape_cast %78 : vector<2x1x8x8xf32> to vector<2x8x8xf32>
    %80 = vector.extract_strided_slice %77 {offsets = [0, 1, 0, 0], sizes = [2, 1, 8, 8], strides = [1, 1, 1, 1]} : vector<2x4x8x8xf32> to vector<2x1x8x8xf32>
    %81 = vector.shape_cast %80 : vector<2x1x8x8xf32> to vector<2x8x8xf32>
    %82 = vector.extract_strided_slice %77 {offsets = [0, 2, 0, 0], sizes = [2, 1, 8, 8], strides = [1, 1, 1, 1]} : vector<2x4x8x8xf32> to vector<2x1x8x8xf32>
    %83 = vector.shape_cast %82 : vector<2x1x8x8xf32> to vector<2x8x8xf32>
    %84 = vector.extract_strided_slice %77 {offsets = [0, 3, 0, 0], sizes = [2, 1, 8, 8], strides = [1, 1, 1, 1]} : vector<2x4x8x8xf32> to vector<2x1x8x8xf32>
    %85 = vector.shape_cast %84 : vector<2x1x8x8xf32> to vector<2x8x8xf32>
    %86 = tpu.concatenate %79, %81, %83, %85 in 2 : vector<2x8x8xf32>, vector<2x8x8xf32>, vector<2x8x8xf32>, vector<2x8x8xf32> -> vector<2x8x32xf32>
    %87 = vector.shape_cast %86 : vector<2x8x32xf32> to vector<16x32xf32>
    %88 = arith.truncf %87 : vector<16x32xf32> to vector<16x32xbf16>
    %c0_22 = arith.constant 0 : index
    %c0_23 = arith.constant 0 : index
    %89 = vector.load %arg9[%c0_22, %c0_23] : memref<32x32xbf16, #tpu.memory_space<vmem>>, vector<32x32xbf16>
    %cst_24 = arith.constant dense<0.000000e+00> : vector<16x32xf32>
    %90 = tpu.matmul %88, %89, %cst_24 {dimension_numbers = #tpu.dot_dimension_numbers<[1], [0], [0], [1], [0, 0, 1, 1], [], []>} : vector<16x32xbf16>, vector<32x32xbf16>, vector<16x32xf32> -> vector<16x32xf32>
    %c0_25 = arith.constant 0 : index
    %c0_26 = arith.constant 0 : index
    %91 = vector.load %arg10[%c0_25, %c0_26] : memref<1x32xf32, #tpu.memory_space<vmem>>, vector<1x32xf32>
    %92 = vector.broadcast %91 : vector<1x32xf32> to vector<16x32xf32>
    %93 = arith.addf %90, %92 : vector<16x32xf32>
    %94 = vector.shape_cast %74 : vector<8x8x8xf32> to vector<2x4x8x8xf32>
    %cst_27 = arith.constant dense<0.000000e+00> : vector<2x8x8xf32>
    %95 = vector.multi_reduction <add>, %94, %cst_27 [1] : vector<2x4x8x8xf32> to vector<2x8x8xf32>
    %cst_28 = arith.constant 4.000000e+00 : f32
    %96 = vector.broadcast %cst_28 : f32 to vector<2x8x8xf32>
    %97 = arith.divf %95, %96 : vector<2x8x8xf32>
    %98 = vector.shape_cast %97 : vector<2x8x8xf32> to vector<16x8xf32>
    %99 = vector.extract_strided_slice %93 {offsets = [0, 0], sizes = [4, 32], strides = [1, 1]} : vector<16x32xf32> to vector<4x32xf32>
    %100 = vector.extract_strided_slice %93 {offsets = [4, 0], sizes = [4, 32], strides = [1, 1]} : vector<16x32xf32> to vector<4x32xf32>
    %101 = vector.extract_strided_slice %93 {offsets = [8, 0], sizes = [4, 32], strides = [1, 1]} : vector<16x32xf32> to vector<4x32xf32>
    %102 = vector.extract_strided_slice %93 {offsets = [12, 0], sizes = [4, 32], strides = [1, 1]} : vector<16x32xf32> to vector<4x32xf32>
    %103 = tpu.concatenate %99, %100, %101, %102 in 1 : vector<4x32xf32>, vector<4x32xf32>, vector<4x32xf32>, vector<4x32xf32> -> vector<4x128xf32>
    %c0_29 = arith.constant 0 : index
    %c0_30 = arith.constant 0 : index
    %104 = vector.load %arg11[%c0_29, %c0_30] : memref<4x128xf32, #tpu.memory_space<vmem>>, vector<4x128xf32>
    tpu.vector_store %arg11[%c0_29, %c0_30], %103 {strides = array<i32>} : memref<4x128xf32, #tpu.memory_space<vmem>>, vector<4x128xf32>,
    %105 = vector.extract_strided_slice %98 {offsets = [0, 0], sizes = [1, 8], strides = [1, 1]} : vector<16x8xf32> to vector<1x8xf32>
    %106 = vector.extract_strided_slice %98 {offsets = [1, 0], sizes = [1, 8], strides = [1, 1]} : vector<16x8xf32> to vector<1x8xf32>
    %107 = vector.extract_strided_slice %98 {offsets = [2, 0], sizes = [1, 8], strides = [1, 1]} : vector<16x8xf32> to vector<1x8xf32>
    %108 = vector.extract_strided_slice %98 {offsets = [3, 0], sizes = [1, 8], strides = [1, 1]} : vector<16x8xf32> to vector<1x8xf32>
    %109 = vector.extract_strided_slice %98 {offsets = [4, 0], sizes = [1, 8], strides = [1, 1]} : vector<16x8xf32> to vector<1x8xf32>
    %110 = vector.extract_strided_slice %98 {offsets = [5, 0], sizes = [1, 8], strides = [1, 1]} : vector<16x8xf32> to vector<1x8xf32>
    %111 = vector.extract_strided_slice %98 {offsets = [6, 0], sizes = [1, 8], strides = [1, 1]} : vector<16x8xf32> to vector<1x8xf32>
    %112 = vector.extract_strided_slice %98 {offsets = [7, 0], sizes = [1, 8], strides = [1, 1]} : vector<16x8xf32> to vector<1x8xf32>
    %113 = vector.extract_strided_slice %98 {offsets = [8, 0], sizes = [1, 8], strides = [1, 1]} : vector<16x8xf32> to vector<1x8xf32>
    %114 = vector.extract_strided_slice %98 {offsets = [9, 0], sizes = [1, 8], strides = [1, 1]} : vector<16x8xf32> to vector<1x8xf32>
    %115 = vector.extract_strided_slice %98 {offsets = [10, 0], sizes = [1, 8], strides = [1, 1]} : vector<16x8xf32> to vector<1x8xf32>
    %116 = vector.extract_strided_slice %98 {offsets = [11, 0], sizes = [1, 8], strides = [1, 1]} : vector<16x8xf32> to vector<1x8xf32>
    %117 = vector.extract_strided_slice %98 {offsets = [12, 0], sizes = [1, 8], strides = [1, 1]} : vector<16x8xf32> to vector<1x8xf32>
    %118 = vector.extract_strided_slice %98 {offsets = [13, 0], sizes = [1, 8], strides = [1, 1]} : vector<16x8xf32> to vector<1x8xf32>
    %119 = vector.extract_strided_slice %98 {offsets = [14, 0], sizes = [1, 8], strides = [1, 1]} : vector<16x8xf32> to vector<1x8xf32>
    %120 = vector.extract_strided_slice %98 {offsets = [15, 0], sizes = [1, 8], strides = [1, 1]} : vector<16x8xf32> to vector<1x8xf32>
    %121 = tpu.concatenate %105, %106, %107, %108, %109, %110, %111, %112, %113, %114, %115, %116, %117, %118, %119, %120 in 1 : vector<1x8xf32>, vector<1x8xf32>, vector<1x8xf32>, vector<1x8xf32>, vector<1x8xf32>, vector<1x8xf32>, vector<1x8xf32>, vector<1x8xf32>, vector<1x8xf32>, vector<1x8xf32>, vector<1x8xf32>, vector<1x8xf32>, vector<1x8xf32>, vector<1x8xf32>, vector<1x8xf32>, vector<1x8xf32> -> vector<1x128xf32>
    %c0_31 = arith.constant 0 : index
    %c0_32 = arith.constant 0 : index
    %122 = vector.load %arg12[%c0_31, %c0_32] : memref<1x128xf32, #tpu.memory_space<vmem>>, vector<1x128xf32>
    tpu.vector_store %arg12[%c0_31, %c0_32], %121 {strides = array<i32>} : memref<1x128xf32, #tpu.memory_space<vmem>>, vector<1x128xf32>,
    return
  }
  func.func @transform_0(%arg0: i32) -> (i32, i32) {
    %c0_i32 = arith.constant 0 : i32
    %c0_i32_0 = arith.constant 0 : i32
    return %arg0, %c0_i32 : i32, i32
  }
  func.func @transform_1(%arg0: i32) -> (i32, i32) {
    %c0_i32 = arith.constant 0 : i32
    %c0_i32_0 = arith.constant 0 : i32
    return %arg0, %c0_i32 : i32, i32
  }
  func.func @transform_2(%arg0: i32) -> (i32, i32) {
    %c0_i32 = arith.constant 0 : i32
    %c0_i32_0 = arith.constant 0 : i32
    %c0_i32_1 = arith.constant 0 : i32
    return %c0_i32, %c0_i32_0 : i32, i32
  }
  func.func @transform_3(%arg0: i32) -> (i32, i32) {
    %c0_i32 = arith.constant 0 : i32
    %c0_i32_0 = arith.constant 0 : i32
    %c0_i32_1 = arith.constant 0 : i32
    return %c0_i32, %c0_i32_0 : i32, i32
  }
  func.func @transform_4(%arg0: i32) -> (i32, i32) {
    %c0_i32 = arith.constant 0 : i32
    %c0_i32_0 = arith.constant 0 : i32
    %c0_i32_1 = arith.constant 0 : i32
    return %c0_i32, %c0_i32_0 : i32, i32
  }
  func.func @transform_5(%arg0: i32) -> (i32, i32) {
    %c0_i32 = arith.constant 0 : i32
    %c0_i32_0 = arith.constant 0 : i32
    %c0_i32_1 = arith.constant 0 : i32
    return %c0_i32, %c0_i32_0 : i32, i32
  }
  func.func @transform_6(%arg0: i32) -> (i32, i32) {
    %c0_i32 = arith.constant 0 : i32
    %c0_i32_0 = arith.constant 0 : i32
    %c0_i32_1 = arith.constant 0 : i32
    return %c0_i32, %c0_i32_0 : i32, i32
  }
  func.func @transform_7(%arg0: i32) -> (i32, i32) {
    %c0_i32 = arith.constant 0 : i32
    %c0_i32_0 = arith.constant 0 : i32
    %c0_i32_1 = arith.constant 0 : i32
    return %c0_i32, %c0_i32_0 : i32, i32
  }
  func.func @transform_8(%arg0: i32) -> (i32, i32) {
    %c0_i32 = arith.constant 0 : i32
    %c0_i32_0 = arith.constant 0 : i32
    %c0_i32_1 = arith.constant 0 : i32
    return %c0_i32, %c0_i32_0 : i32, i32
  }
  func.func @transform_9(%arg0: i32) -> (i32, i32) {
    %c0_i32 = arith.constant 0 : i32
    %c0_i32_0 = arith.constant 0 : i32
    %c0_i32_1 = arith.constant 0 : i32
    return %c0_i32, %c0_i32_0 : i32, i32
  }
  func.func @transform_10(%arg0: i32) -> (i32, i32) {
    %c0_i32 = arith.constant 0 : i32
    %c0_i32_0 = arith.constant 0 : i32
    return %arg0, %c0_i32 : i32, i32
  }
  func.func @transform_11(%arg0: i32) -> (i32, i32) {
    %c0_i32 = arith.constant 0 : i32
    %c0_i32_0 = arith.constant 0 : i32
    return %arg0, %c0_i32 : i32, i32
  }
}

module attributes {stable_mosaic.version = 11 : i64} {
  func.func @kernel(%arg0: i32, %arg1: memref<16x32xbf16, #tpu.memory_space<vmem>>, %arg2: memref<16x16xbf16, #tpu.memory_space<vmem>>, %arg3: memref<32x32xbf16, #tpu.memory_space<vmem>>, %arg4: memref<1x32xf32, #tpu.memory_space<vmem>>, %arg5: memref<16x32xbf16, #tpu.memory_space<vmem>>, %arg6: memref<1x32xf32, #tpu.memory_space<vmem>>, %arg7: memref<16x32xbf16, #tpu.memory_space<vmem>>, %arg8: memref<1x32xf32, #tpu.memory_space<vmem>>, %arg9: memref<32x32xbf16, #tpu.memory_space<vmem>>, %arg10: memref<1x32xf32, #tpu.memory_space<vmem>>, %arg11: memref<4x128xf32, #tpu.memory_space<vmem>>, %arg12: memref<1x128xf32, #tpu.memory_space<vmem>>) attributes {dimension_semantics = [#tpu.dimension_semantics<parallel>], iteration_bounds = array<i64: 1>, scalar_prefetch = 0 : i64, scratch_operands = 0 : i64, tpu.core_type = #tpu.core_type<tc>, window_params = [{transform_indices = @transform_0, window_bounds = array<i64: 16, 32>}, {transform_indices = @transform_1, window_bounds = array<i64: 16, 16>}, {pipeline_mode = #tpu.pipeline_mode<synchronous>, transform_indices = @transform_2, window_bounds = array<i64: 32, 32>}, {pipeline_mode = #tpu.pipeline_mode<synchronous>, transform_indices = @transform_3, window_bounds = array<i64: 1, 32>}, {pipeline_mode = #tpu.pipeline_mode<synchronous>, transform_indices = @transform_4, window_bounds = array<i64: 16, 32>}, {pipeline_mode = #tpu.pipeline_mode<synchronous>, transform_indices = @transform_5, window_bounds = array<i64: 1, 32>}, {pipeline_mode = #tpu.pipeline_mode<synchronous>, transform_indices = @transform_6, window_bounds = array<i64: 16, 32>}, {pipeline_mode = #tpu.pipeline_mode<synchronous>, transform_indices = @transform_7, window_bounds = array<i64: 1, 32>}, {pipeline_mode = #tpu.pipeline_mode<synchronous>, transform_indices = @transform_8, window_bounds = array<i64: 32, 32>}, {pipeline_mode = #tpu.pipeline_mode<synchronous>, transform_indices = @transform_9, window_bounds = array<i64: 1, 32>}, {transform_indices = @transform_10, window_bounds = array<i64: 4, 128>}, {transform_indices = @transform_11, window_bounds = array<i64: 1, 128>}]} {
    %c0 = arith.constant 0 : index
    %c0_0 = arith.constant 0 : index
    %0 = vector.load %arg1[%c0, %c0_0] : memref<16x32xbf16, #tpu.memory_space<vmem>>, vector<16x32xbf16>
    %c0_1 = arith.constant 0 : index
    %c0_2 = arith.constant 0 : index
    %1 = vector.load %arg2[%c0_1, %c0_2] : memref<16x16xbf16, #tpu.memory_space<vmem>>, vector<16x16xbf16>
    %c0_3 = arith.constant 0 : index
    %c0_4 = arith.constant 0 : index
    %2 = vector.load %arg3[%c0_3, %c0_4] : memref<32x32xbf16, #tpu.memory_space<vmem>>, vector<32x32xbf16>
    %cst = arith.constant dense<0.000000e+00> : vector<16x32xf32>
    %3 = tpu.matmul %0, %2, %cst {dimension_numbers = #tpu.dot_dimension_numbers<[1], [0], [0], [1], [0, 0, 1, 1], [], []>} : vector<16x32xbf16>, vector<32x32xbf16>, vector<16x32xf32> -> vector<16x32xf32>
    %c0_5 = arith.constant 0 : index
    %c0_6 = arith.constant 0 : index
    %4 = vector.load %arg4[%c0_5, %c0_6] : memref<1x32xf32, #tpu.memory_space<vmem>>, vector<1x32xf32>
    %5 = vector.broadcast %4 : vector<1x32xf32> to vector<16x32xf32>
    %6 = arith.addf %3, %5 : vector<16x32xf32>
    %c0_7 = arith.constant 0 : index
    %c0_8 = arith.constant 0 : index
    %7 = vector.load %arg5[%c0_7, %c0_8] : memref<16x32xbf16, #tpu.memory_space<vmem>>, vector<16x32xbf16>
    %cst_9 = arith.constant dense<0.000000e+00> : vector<16x32xf32>
    %8 = tpu.matmul %1, %7, %cst_9 {dimension_numbers = #tpu.dot_dimension_numbers<[1], [0], [0], [1], [0, 0, 1, 1], [], []>} : vector<16x16xbf16>, vector<16x32xbf16>, vector<16x32xf32> -> vector<16x32xf32>
    %c0_10 = arith.constant 0 : index
    %c0_11 = arith.constant 0 : index
    %9 = vector.load %arg6[%c0_10, %c0_11] : memref<1x32xf32, #tpu.memory_space<vmem>>, vector<1x32xf32>
    %10 = vector.broadcast %9 : vector<1x32xf32> to vector<16x32xf32>
    %11 = arith.addf %8, %10 : vector<16x32xf32>
    %c0_12 = arith.constant 0 : index
    %c0_13 = arith.constant 0 : index
    %12 = vector.load %arg7[%c0_12, %c0_13] : memref<16x32xbf16, #tpu.memory_space<vmem>>, vector<16x32xbf16>
    %cst_14 = arith.constant dense<0.000000e+00> : vector<16x32xf32>
    %13 = tpu.matmul %1, %12, %cst_14 {dimension_numbers = #tpu.dot_dimension_numbers<[1], [0], [0], [1], [0, 0, 1, 1], [], []>} : vector<16x16xbf16>, vector<16x32xbf16>, vector<16x32xf32> -> vector<16x32xf32>
    %c0_15 = arith.constant 0 : index
    %c0_16 = arith.constant 0 : index
    %14 = vector.load %arg8[%c0_15, %c0_16] : memref<1x32xf32, #tpu.memory_space<vmem>>, vector<1x32xf32>
    %15 = vector.broadcast %14 : vector<1x32xf32> to vector<16x32xf32>
    %16 = arith.addf %13, %15 : vector<16x32xf32>
    %17 = vector.extract_strided_slice %6 {offsets = [0, 0], sizes = [16, 8], strides = [1, 1]} : vector<16x32xf32> to vector<16x8xf32>
    %18 = vector.shape_cast %17 : vector<16x8xf32> to vector<2x8x8xf32>
    %19 = vector.extract_strided_slice %6 {offsets = [0, 8], sizes = [16, 8], strides = [1, 1]} : vector<16x32xf32> to vector<16x8xf32>
    %20 = vector.shape_cast %19 : vector<16x8xf32> to vector<2x8x8xf32>
    %21 = vector.extract_strided_slice %6 {offsets = [0, 16], sizes = [16, 8], strides = [1, 1]} : vector<16x32xf32> to vector<16x8xf32>
    %22 = vector.shape_cast %21 : vector<16x8xf32> to vector<2x8x8xf32>
    %23 = vector.extract_strided_slice %6 {offsets = [0, 24], sizes = [16, 8], strides = [1, 1]} : vector<16x32xf32> to vector<16x8xf32>
    %24 = vector.shape_cast %23 : vector<16x8xf32> to vector<2x8x8xf32>
    %25 = vector.shape_cast %18 : vector<2x8x8xf32> to vector<2x1x8x8xf32>
    %26 = vector.shape_cast %20 : vector<2x8x8xf32> to vector<2x1x8x8xf32>
    %27 = vector.shape_cast %22 : vector<2x8x8xf32> to vector<2x1x8x8xf32>
    %28 = vector.shape_cast %24 : vector<2x8x8xf32> to vector<2x1x8x8xf32>
    %29 = tpu.concatenate %25, %26, %27, %28 in 1 : vector<2x1x8x8xf32>, vector<2x1x8x8xf32>, vector<2x1x8x8xf32>, vector<2x1x8x8xf32> -> vector<2x4x8x8xf32>
    %30 = vector.shape_cast %29 : vector<2x4x8x8xf32> to vector<8x8x8xf32>
    %31 = arith.truncf %30 : vector<8x8x8xf32> to vector<8x8x8xbf16>
    %32 = vector.extract_strided_slice %11 {offsets = [0, 0], sizes = [16, 8], strides = [1, 1]} : vector<16x32xf32> to vector<16x8xf32>
    %33 = vector.shape_cast %32 : vector<16x8xf32> to vector<2x8x8xf32>
    %34 = vector.extract_strided_slice %11 {offsets = [0, 8], sizes = [16, 8], strides = [1, 1]} : vector<16x32xf32> to vector<16x8xf32>
    %35 = vector.shape_cast %34 : vector<16x8xf32> to vector<2x8x8xf32>
    %36 = vector.extract_strided_slice %11 {offsets = [0, 16], sizes = [16, 8], strides = [1, 1]} : vector<16x32xf32> to vector<16x8xf32>
    %37 = vector.shape_cast %36 : vector<16x8xf32> to vector<2x8x8xf32>
    %38 = vector.extract_strided_slice %11 {offsets = [0, 24], sizes = [16, 8], strides = [1, 1]} : vector<16x32xf32> to vector<16x8xf32>
    %39 = vector.shape_cast %38 : vector<16x8xf32> to vector<2x8x8xf32>
    %40 = vector.shape_cast %33 : vector<2x8x8xf32> to vector<2x1x8x8xf32>
    %41 = vector.shape_cast %35 : vector<2x8x8xf32> to vector<2x1x8x8xf32>
    %42 = vector.shape_cast %37 : vector<2x8x8xf32> to vector<2x1x8x8xf32>
    %43 = vector.shape_cast %39 : vector<2x8x8xf32> to vector<2x1x8x8xf32>
    %44 = tpu.concatenate %40, %41, %42, %43 in 1 : vector<2x1x8x8xf32>, vector<2x1x8x8xf32>, vector<2x1x8x8xf32>, vector<2x1x8x8xf32> -> vector<2x4x8x8xf32>
    %45 = vector.shape_cast %44 : vector<2x4x8x8xf32> to vector<8x8x8xf32>
    %46 = arith.truncf %45 : vector<8x8x8xf32> to vector<8x8x8xbf16>
    %47 = vector.extract_strided_slice %16 {offsets = [0, 0], sizes = [16, 8], strides = [1, 1]} : vector<16x32xf32> to vector<16x8xf32>
    %48 = vector.shape_cast %47 : vector<16x8xf32> to vector<2x8x8xf32>
    %49 = vector.extract_strided_slice %16 {offsets = [0, 8], sizes = [16, 8], strides = [1, 1]} : vector<16x32xf32> to vector<16x8xf32>
    %50 = vector.shape_cast %49 : vector<16x8xf32> to vector<2x8x8xf32>
    %51 = vector.extract_strided_slice %16 {offsets = [0, 16], sizes = [16, 8], strides = [1, 1]} : vector<16x32xf32> to vector<16x8xf32>
    %52 = vector.shape_cast %51 : vector<16x8xf32> to vector<2x8x8xf32>
    %53 = vector.extract_strided_slice %16 {offsets = [0, 24], sizes = [16, 8], strides = [1, 1]} : vector<16x32xf32> to vector<16x8xf32>
    %54 = vector.shape_cast %53 : vector<16x8xf32> to vector<2x8x8xf32>
    %55 = vector.shape_cast %48 : vector<2x8x8xf32> to vector<2x1x8x8xf32>
    %56 = vector.shape_cast %50 : vector<2x8x8xf32> to vector<2x1x8x8xf32>
    %57 = vector.shape_cast %52 : vector<2x8x8xf32> to vector<2x1x8x8xf32>
    %58 = vector.shape_cast %54 : vector<2x8x8xf32> to vector<2x1x8x8xf32>
    %59 = tpu.concatenate %55, %56, %57, %58 in 1 : vector<2x1x8x8xf32>, vector<2x1x8x8xf32>, vector<2x1x8x8xf32>, vector<2x1x8x8xf32> -> vector<2x4x8x8xf32>
    %60 = vector.shape_cast %59 : vector<2x4x8x8xf32> to vector<8x8x8xf32>
    %61 = arith.truncf %60 : vector<8x8x8xf32> to vector<8x8x8xbf16>
    "tpu.trace_start"() <{level = 10 : i32, message = "bqd,bkd->bqk"}> : () -> ()
    %cst_17 = arith.constant dense<0.000000e+00> : vector<8x8x8xf32>
    %62 = tpu.matmul %31, %46, %cst_17 {dimension_numbers = #tpu.dot_dimension_numbers<[2], [2], [1], [1], [0, 0, 0, 1, 1, 1], [0], [0]>} : vector<8x8x8xbf16>, vector<8x8x8xbf16>, vector<8x8x8xf32> -> vector<8x8x8xf32>
    "tpu.trace_stop"() : () -> ()
    %cst_18 = arith.constant 0.353553385 : f32
    %63 = vector.broadcast %cst_18 : f32 to vector<8x8x8xf32>
    %64 = arith.mulf %62, %63 : vector<8x8x8xf32>
    %cst_19 = arith.constant dense<0xFF800000> : vector<8x8xf32>
    %65 = vector.multi_reduction <maximumf>, %64, %cst_19 [2] : vector<8x8x8xf32> to vector<8x8xf32>
    %66 = vector.shape_cast %65 : vector<8x8xf32> to vector<8x8x1xf32>
    %67 = vector.broadcast %66 : vector<8x8x1xf32> to vector<8x8x8xf32>
    %68 = arith.subf %64, %67 : vector<8x8x8xf32>
    %69 = math.exp %68 : vector<8x8x8xf32>
    %cst_20 = arith.constant dense<0.000000e+00> : vector<8x8xf32>
    %70 = vector.multi_reduction <add>, %69, %cst_20 [2] : vector<8x8x8xf32> to vector<8x8xf32>
    %71 = vector.shape_cast %70 : vector<8x8xf32> to vector<8x8x1xf32>
    %72 = tpu.reciprocal %71 {approx = true} : vector<8x8x1xf32> -> vector<8x8x1xf32>
    %73 = vector.broadcast %72 : vector<8x8x1xf32> to vector<8x8x8xf32>
    %74 = arith.mulf %69, %73 : vector<8x8x8xf32>
    %75 = arith.truncf %74 : vector<8x8x8xf32> to vector<8x8x8xbf16>
    "tpu.trace_start"() <{level = 10 : i32, message = "bqk,bkd->bqd"}> : () -> ()
    %cst_21 = arith.constant dense<0.000000e+00> : vector<8x8x8xf32>
    %76 = tpu.matmul %75, %61, %cst_21 {dimension_numbers = #tpu.dot_dimension_numbers<[2], [1], [1], [2], [0, 0, 0, 1, 1, 2], [0], [0]>} : vector<8x8x8xbf16>, vector<8x8x8xbf16>, vector<8x8x8xf32> -> vector<8x8x8xf32>
    "tpu.trace_stop"() : () -> ()
    %77 = vector.shape_cast %76 : vector<8x8x8xf32> to vector<2x4x8x8xf32>
    %78 = vector.extract_strided_slice %77 {offsets = [0, 0, 0, 0], sizes = [2, 1, 8, 8], strides = [1, 1, 1, 1]} : vector<2x4x8x8xf32> to vector<2x1x8x8xf32>
    %79 = vector.shape_cast %78 : vector<2x1x8x8xf32> to vector<2x8x8xf32>
    %80 = vector.extract_strided_slice %77 {offsets = [0, 1, 0, 0], sizes = [2, 1, 8, 8], strides = [1, 1, 1, 1]} : vector<2x4x8x8xf32> to vector<2x1x8x8xf32>
    %81 = vector.shape_cast %80 : vector<2x1x8x8xf32> to vector<2x8x8xf32>
    %82 = vector.extract_strided_slice %77 {offsets = [0, 2, 0, 0], sizes = [2, 1, 8, 8], strides = [1, 1, 1, 1]} : vector<2x4x8x8xf32> to vector<2x1x8x8xf32>
    %83 = vector.shape_cast %82 : vector<2x1x8x8xf32> to vector<2x8x8xf32>
    %84 = vector.extract_strided_slice %77 {offsets = [0, 3, 0, 0], sizes = [2, 1, 8, 8], strides = [1, 1, 1, 1]} : vector<2x4x8x8xf32> to vector<2x1x8x8xf32>
    %85 = vector.shape_cast %84 : vector<2x1x8x8xf32> to vector<2x8x8xf32>
    %86 = tpu.concatenate %79, %81, %83, %85 in 2 : vector<2x8x8xf32>, vector<2x8x8xf32>, vector<2x8x8xf32>, vector<2x8x8xf32> -> vector<2x8x32xf32>
    %87 = vector.shape_cast %86 : vector<2x8x32xf32> to vector<16x32xf32>
    %88 = arith.truncf %87 : vector<16x32xf32> to vector<16x32xbf16>
    %c0_22 = arith.constant 0 : index
    %c0_23 = arith.constant 0 : index
    %89 = vector.load %arg9[%c0_22, %c0_23] : memref<32x32xbf16, #tpu.memory_space<vmem>>, vector<32x32xbf16>
    %cst_24 = arith.constant dense<0.000000e+00> : vector<16x32xf32>
    %90 = tpu.matmul %88, %89, %cst_24 {dimension_numbers = #tpu.dot_dimension_numbers<[1], [0], [0], [1], [0, 0, 1, 1], [], []>} : vector<16x32xbf16>, vector<32x32xbf16>, vector<16x32xf32> -> vector<16x32xf32>
    %c0_25 = arith.constant 0 : index
    %c0_26 = arith.constant 0 : index
    %91 = vector.load %arg10[%c0_25, %c0_26] : memref<1x32xf32, #tpu.memory_space<vmem>>, vector<1x32xf32>
    %92 = vector.broadcast %91 : vector<1x32xf32> to vector<16x32xf32>
    %93 = arith.addf %90, %92 : vector<16x32xf32>
    %94 = vector.shape_cast %74 : vector<8x8x8xf32> to vector<2x4x8x8xf32>
    %cst_27 = arith.constant dense<0.000000e+00> : vector<2x8x8xf32>
    %95 = vector.multi_reduction <add>, %94, %cst_27 [1] : vector<2x4x8x8xf32> to vector<2x8x8xf32>
    %cst_28 = arith.constant 4.000000e+00 : f32
    %96 = vector.broadcast %cst_28 : f32 to vector<2x8x8xf32>
    %97 = arith.divf %95, %96 : vector<2x8x8xf32>
    %98 = vector.shape_cast %97 : vector<2x8x8xf32> to vector<16x8xf32>
    %99 = vector.extract_strided_slice %93 {offsets = [0, 0], sizes = [4, 32], strides = [1, 1]} : vector<16x32xf32> to vector<4x32xf32>
    %100 = vector.extract_strided_slice %93 {offsets = [4, 0], sizes = [4, 32], strides = [1, 1]} : vector<16x32xf32> to vector<4x32xf32>
    %101 = vector.extract_strided_slice %93 {offsets = [8, 0], sizes = [4, 32], strides = [1, 1]} : vector<16x32xf32> to vector<4x32xf32>
    %102 = vector.extract_strided_slice %93 {offsets = [12, 0], sizes = [4, 32], strides = [1, 1]} : vector<16x32xf32> to vector<4x32xf32>
    %103 = tpu.concatenate %99, %100, %101, %102 in 1 : vector<4x32xf32>, vector<4x32xf32>, vector<4x32xf32>, vector<4x32xf32> -> vector<4x128xf32>
    %c0_29 = arith.constant 0 : index
    %c0_30 = arith.constant 0 : index
    %104 = vector.load %arg11[%c0_29, %c0_30] : memref<4x128xf32, #tpu.memory_space<vmem>>, vector<4x128xf32>
    tpu.vector_store %arg11[%c0_29, %c0_30], %103 {strides = array<i32>} : memref<4x128xf32, #tpu.memory_space<vmem>>, vector<4x128xf32>,
    %105 = vector.extract_strided_slice %98 {offsets = [0, 0], sizes = [1, 8], strides = [1, 1]} : vector<16x8xf32> to vector<1x8xf32>
    %106 = vector.extract_strided_slice %98 {offsets = [1, 0], sizes = [1, 8], strides = [1, 1]} : vector<16x8xf32> to vector<1x8xf32>
    %107 = vector.extract_strided_slice %98 {offsets = [2, 0], sizes = [1, 8], strides = [1, 1]} : vector<16x8xf32> to vector<1x8xf32>
    %108 = vector.extract_strided_slice %98 {offsets = [3, 0], sizes = [1, 8], strides = [1, 1]} : vector<16x8xf32> to vector<1x8xf32>
    %109 = vector.extract_strided_slice %98 {offsets = [4, 0], sizes = [1, 8], strides = [1, 1]} : vector<16x8xf32> to vector<1x8xf32>
    %110 = vector.extract_strided_slice %98 {offsets = [5, 0], sizes = [1, 8], strides = [1, 1]} : vector<16x8xf32> to vector<1x8xf32>
    %111 = vector.extract_strided_slice %98 {offsets = [6, 0], sizes = [1, 8], strides = [1, 1]} : vector<16x8xf32> to vector<1x8xf32>
    %112 = vector.extract_strided_slice %98 {offsets = [7, 0], sizes = [1, 8], strides = [1, 1]} : vector<16x8xf32> to vector<1x8xf32>
    %113 = vector.extract_strided_slice %98 {offsets = [8, 0], sizes = [1, 8], strides = [1, 1]} : vector<16x8xf32> to vector<1x8xf32>
    %114 = vector.extract_strided_slice %98 {offsets = [9, 0], sizes = [1, 8], strides = [1, 1]} : vector<16x8xf32> to vector<1x8xf32>
    %115 = vector.extract_strided_slice %98 {offsets = [10, 0], sizes = [1, 8], strides = [1, 1]} : vector<16x8xf32> to vector<1x8xf32>
    %116 = vector.extract_strided_slice %98 {offsets = [11, 0], sizes = [1, 8], strides = [1, 1]} : vector<16x8xf32> to vector<1x8xf32>
    %117 = vector.extract_strided_slice %98 {offsets = [12, 0], sizes = [1, 8], strides = [1, 1]} : vector<16x8xf32> to vector<1x8xf32>
    %118 = vector.extract_strided_slice %98 {offsets = [13, 0], sizes = [1, 8], strides = [1, 1]} : vector<16x8xf32> to vector<1x8xf32>
    %119 = vector.extract_strided_slice %98 {offsets = [14, 0], sizes = [1, 8], strides = [1, 1]} : vector<16x8xf32> to vector<1x8xf32>
    %120 = vector.extract_strided_slice %98 {offsets = [15, 0], sizes = [1, 8], strides = [1, 1]} : vector<16x8xf32> to vector<1x8xf32>
    %121 = tpu.concatenate %105, %106, %107, %108, %109, %110, %111, %112, %113, %114, %115, %116, %117, %118, %119, %120 in 1 : vector<1x8xf32>, vector<1x8xf32>, vector<1x8xf32>, vector<1x8xf32>, vector<1x8xf32>, vector<1x8xf32>, vector<1x8xf32>, vector<1x8xf32>, vector<1x8xf32>, vector<1x8xf32>, vector<1x8xf32>, vector<1x8xf32>, vector<1x8xf32>, vector<1x8xf32>, vector<1x8xf32>, vector<1x8xf32> -> vector<1x128xf32>
    %c0_31 = arith.constant 0 : index
    %c0_32 = arith.constant 0 : index
    %122 = vector.load %arg12[%c0_31, %c0_32] : memref<1x128xf32, #tpu.memory_space<vmem>>, vector<1x128xf32>
    tpu.vector_store %arg12[%c0_31, %c0_32], %121 {strides = array<i32>} : memref<1x128xf32, #tpu.memory_space<vmem>>, vector<1x128xf32>,
    return
  }
  func.func @transform_0(%arg0: i32) -> (i32, i32) {
    %c0_i32 = arith.constant 0 : i32
    %c0_i32_0 = arith.constant 0 : i32
    return %arg0, %c0_i32 : i32, i32
  }
  func.func @transform_1(%arg0: i32) -> (i32, i32) {
    %c0_i32 = arith.constant 0 : i32
    %c0_i32_0 = arith.constant 0 : i32
    return %arg0, %c0_i32 : i32, i32
  }
  func.func @transform_2(%arg0: i32) -> (i32, i32) {
    %c0_i32 = arith.constant 0 : i32
    %c0_i32_0 = arith.constant 0 : i32
    %c0_i32_1 = arith.constant 0 : i32
    return %c0_i32, %c0_i32_0 : i32, i32
  }
  func.func @transform_3(%arg0: i32) -> (i32, i32) {
    %c0_i32 = arith.constant 0 : i32
    %c0_i32_0 = arith.constant 0 : i32
    %c0_i32_1 = arith.constant 0 : i32
    return %c0_i32, %c0_i32_0 : i32, i32
  }
  func.func @transform_4(%arg0: i32) -> (i32, i32) {
    %c0_i32 = arith.constant 0 : i32
    %c0_i32_0 = arith.constant 0 : i32
    %c0_i32_1 = arith.constant 0 : i32
    return %c0_i32, %c0_i32_0 : i32, i32
  }
  func.func @transform_5(%arg0: i32) -> (i32, i32) {
    %c0_i32 = arith.constant 0 : i32
    %c0_i32_0 = arith.constant 0 : i32
    %c0_i32_1 = arith.constant 0 : i32
    return %c0_i32, %c0_i32_0 : i32, i32
  }
  func.func @transform_6(%arg0: i32) -> (i32, i32) {
    %c0_i32 = arith.constant 0 : i32
    %c0_i32_0 = arith.constant 0 : i32
    %c0_i32_1 = arith.constant 0 : i32
    return %c0_i32, %c0_i32_0 : i32, i32
  }
  func.func @transform_7(%arg0: i32) -> (i32, i32) {
    %c0_i32 = arith.constant 0 : i32
    %c0_i32_0 = arith.constant 0 : i32
    %c0_i32_1 = arith.constant 0 : i32
    return %c0_i32, %c0_i32_0 : i32, i32
  }
  func.func @transform_8(%arg0: i32) -> (i32, i32) {
    %c0_i32 = arith.constant 0 : i32
    %c0_i32_0 = arith.constant 0 : i32
    %c0_i32_1 = arith.constant 0 : i32
    return %c0_i32, %c0_i32_0 : i32, i32
  }
  func.func @transform_9(%arg0: i32) -> (i32, i32) {
    %c0_i32 = arith.constant 0 : i32
    %c0_i32_0 = arith.constant 0 : i32
    %c0_i32_1 = arith.constant 0 : i32
    return %c0_i32, %c0_i32_0 : i32, i32
  }
  func.func @transform_10(%arg0: i32) -> (i32, i32) {
    %c0_i32 = arith.constant 0 : i32
    %c0_i32_0 = arith.constant 0 : i32
    return %arg0, %c0_i32 : i32, i32
  }
  func.func @transform_11(%arg0: i32) -> (i32, i32) {
    %c0_i32 = arith.constant 0 : i32
    %c0_i32_0 = arith.constant 0 : i32
    return %arg0, %c0_i32 : i32, i32
  }
}

</mosaic_0001>

<llo_original>
// kernel: tpu_custom_call.1
$region0: #{tpu_custom_call.1}
  #allocation0 [shape = 'u32[]', space=smem, size = 0x4, offset = 0x4, fixed_abs, tag = 'smem constant byte address 0x4 - core index']
  #allocation1 [shape = 'u32[72,128]{1,0:T(1,128)}', space=vmem, size = 0x9000, scoped, tag = 'internal scratch']
  %s0 = inlined_call_operand.hbm [shape: bf16[16,32], index: 0, kind: input, shape index: {}]
  %s1 = inlined_call_operand.hbm [shape: bf16[16,16], index: 1, kind: input, shape index: {}]
  %s2 = inlined_call_operand.hbm [shape: bf16[32,32], index: 2, kind: input, shape index: {}]
  %s3 = inlined_call_operand.vmem [shape: f32[1,32], index: 3, kind: input, shape index: {}]
  %s4 = inlined_call_operand.hbm [shape: bf16[16,32], index: 4, kind: input, shape index: {}]
  %s5 = inlined_call_operand.vmem [shape: f32[1,32], index: 5, kind: input, shape index: {}]
  %s6 = inlined_call_operand.hbm [shape: bf16[16,32], index: 6, kind: input, shape index: {}]
  %s7 = inlined_call_operand.vmem [shape: f32[1,32], index: 7, kind: input, shape index: {}]
  %s8 = inlined_call_operand.hbm [shape: bf16[32,32], index: 8, kind: input, shape index: {}]
  %s9 = inlined_call_operand.vmem [shape: f32[1,32], index: 9, kind: input, shape index: {}]
  %s10 = inlined_call_operand.hbm [shape: f32[4,128], index: 10, kind: output, shape index: {0}]
  %s11 = inlined_call_operand.hbm [shape: f32[1,128], index: 11, kind: output, shape index: {1}]
  %12 = xla_tuple %s10, %s11
  %s13 = sld [smem:[#allocation0]]
  $region82: #{tpu_custom_call.1} parent=0
    _
  %s15 = ssub.s32 1, %s13
  %s16 = scalar_select 0, %s15, %s13
  $region1: #{tpu_custom_call.1} parent=0
    #allocation2 [shape = 'u8[4096]{0}', space=vmem, size = 0x1000, scoped, tag = 'input window, operand 0, single buffered']
    #allocation3 [shape = 's32[1]{0}', space=sflag, size = 0x4, scoped, tag = 'scoped memory for tpu_custom_call.1']
    #allocation4 [shape = 's32[1]{0}', space=sflag, size = 0x4, scoped, tag = 'scoped memory for tpu_custom_call.1']
    #allocation5 [shape = 'u8[4096]{0}', space=vmem, size = 0x1000, scoped, tag = 'input window, operand 1, single buffered']
    #allocation6 [shape = 's32[1]{0}', space=sflag, size = 0x4, scoped, tag = 'scoped memory for tpu_custom_call.1']
    #allocation7 [shape = 'u8[8192]{0}', space=vmem, size = 0x2000, scoped, tag = 'input window, operand 2, single buffered']
    #allocation8 [shape = 'u8[4096]{0}', space=vmem, size = 0x1000, scoped, tag = 'input window, operand 4, single buffered']
    #allocation9 [shape = 's32[1]{0}', space=sflag, size = 0x4, scoped, tag = 'scoped memory for tpu_custom_call.1']
    #allocation10 [shape = 'u8[4096]{0}', space=vmem, size = 0x1000, scoped, tag = 'input window, operand 6, single buffered']
    #allocation11 [shape = 'u8[8192]{0}', space=vmem, size = 0x2000, scoped, tag = 'input window, operand 8, single buffered']
    #allocation12 [shape = 's32[1]{0}', space=sflag, size = 0x4, scoped, tag = 'scoped memory for tpu_custom_call.1']
    #allocation13 [shape = 'u8[2048]{0}', space=vmem, size = 0x800, scoped, tag = 'output window, operand 0, single buffered']
    #allocation14 [shape = 'u8[512]{0}', space=vmem, size = 0x400, scoped, tag = 'output window, operand 1, single buffered']
    #allocation15 [shape = 's32[1]{0}', space=sflag, size = 0x4, scoped, tag = 'scoped memory for tpu_custom_call.1']
    %17 = vsyncpa [#allocation3], 0
    %18 = vsyncpa [#allocation6], 0
    %19 = vsyncpa [#allocation9], 0
    %20 = vsyncpa [#allocation12], 0
    %21 = vsyncpa [#allocation4], 0
    %22 = vsyncpa [#allocation15], 0
    // Predicated region
    $region2: #{tpu_custom_call.1} parent=1 // pred_check
      _
    $region3: #{tpu_custom_call.1} parent=1 // pred_check_branch
      %24 = sbr.rel (0) target = $region5
    $region4: #{tpu_custom_call.1} parent=1 // pred_region
      %26 = vsyncadd [#allocation3], 0
      %s27 = sshll.u32 %s0, 4
      %s28 = int_to_ptr.hbm [resolvable:$true] %s27
      %s29 = sshll.u32 [#allocation2], 4
      %s30 = int_to_ptr.vmem [resolvable:$true] %s29
      %35 = dma.hbm_to_vmem [thread:$0]  %s28, 128, %s30, [#allocation3], 64, 64, 4
    $region5: #{tpu_custom_call.1} parent=1 // pred_fallthru
      _
    // Predicated region
    $region6: #{tpu_custom_call.1} parent=1 // pred_check
      _
    $region7: #{tpu_custom_call.1} parent=1 // pred_check_branch
      %37 = sbr.rel (0) target = $region9
    $region8: #{tpu_custom_call.1} parent=1 // pred_region
      %39 = vsyncadd [#allocation6], 0
      %s40 = sshll.u32 %s1, 4
      %s41 = int_to_ptr.hbm [resolvable:$true] %s40
      %s42 = sshll.u32 [#allocation5], 4
      %s43 = int_to_ptr.vmem [resolvable:$true] %s42
      %48 = dma.hbm_to_vmem [thread:$0]  %s41, 128, %s43, [#allocation6], 64, 64, 4
    $region9: #{tpu_custom_call.1} parent=1 // pred_fallthru
      _
    // Predicated region
    $region10: #{tpu_custom_call.1} parent=1 // pred_check
      _
    $region11: #{tpu_custom_call.1} parent=1 // pred_check_branch
      %50 = sbr.rel (0) target = $region13
    $region12: #{tpu_custom_call.1} parent=1 // pred_region
      %52 = vsyncadd [#allocation6], 0
      %s53 = sshll.u32 %s2, 4
      %s54 = int_to_ptr.hbm [resolvable:$true] %s53
      %s55 = sshll.u32 [#allocation7], 4
      %s56 = int_to_ptr.vmem [resolvable:$true] %s55
      %61 = dma.hbm_to_vmem [thread:$0]  %s54, 256, %s56, [#allocation6], 64, 64, 4
    $region13: #{tpu_custom_call.1} parent=1 // pred_fallthru
      _
    // Predicated region
    $region14: #{tpu_custom_call.1} parent=1 // pred_check
      _
    $region15: #{tpu_custom_call.1} parent=1 // pred_check_branch
      %63 = sbr.rel (0) target = $region17
    $region16: #{tpu_custom_call.1} parent=1 // pred_region
      _
    $region17: #{tpu_custom_call.1} parent=1 // pred_fallthru
      _
    // Predicated region
    $region18: #{tpu_custom_call.1} parent=1 // pred_check
      _
    $region19: #{tpu_custom_call.1} parent=1 // pred_check_branch
      %65 = sbr.rel (0) target = $region21
    $region20: #{tpu_custom_call.1} parent=1 // pred_region
      %67 = vsyncadd [#allocation9], 0
      %s68 = sshll.u32 %s4, 4
      %s69 = int_to_ptr.hbm [resolvable:$true] %s68
      %s70 = sshll.u32 [#allocation8], 4
      %s71 = int_to_ptr.vmem [resolvable:$true] %s70
      %76 = dma.hbm_to_vmem [thread:$0]  %s69, 128, %s71, [#allocation9], 64, 64, 4
    $region21: #{tpu_custom_call.1} parent=1 // pred_fallthru
      _
    // Predicated region
    $region22: #{tpu_custom_call.1} parent=1 // pred_check
      _
    $region23: #{tpu_custom_call.1} parent=1 // pred_check_branch
      %78 = sbr.rel (0) target = $region25
    $region24: #{tpu_custom_call.1} parent=1 // pred_region
      _
    $region25: #{tpu_custom_call.1} parent=1 // pred_fallthru
      _
    // Predicated region
    $region26: #{tpu_custom_call.1} parent=1 // pred_check
      _
    $region27: #{tpu_custom_call.1} parent=1 // pred_check_branch
      %80 = sbr.rel (0) target = $region29
    $region28: #{tpu_custom_call.1} parent=1 // pred_region
      %82 = vsyncadd [#allocation9], 0
      %s83 = sshll.u32 %s6, 4
      %s84 = int_to_ptr.hbm [resolvable:$true] %s83
      %s85 = sshll.u32 [#allocation10], 4
      %s86 = int_to_ptr.vmem [resolvable:$true] %s85
      %91 = dma.hbm_to_vmem [thread:$0]  %s84, 128, %s86, [#allocation9], 64, 64, 4
    $region29: #{tpu_custom_call.1} parent=1 // pred_fallthru
      _
    // Predicated region
    $region30: #{tpu_custom_call.1} parent=1 // pred_check
      _
    $region31: #{tpu_custom_call.1} parent=1 // pred_check_branch
      %93 = sbr.rel (0) target = $region33
    $region32: #{tpu_custom_call.1} parent=1 // pred_region
      _
    $region33: #{tpu_custom_call.1} parent=1 // pred_fallthru
      _
    // Predicated region
    $region34: #{tpu_custom_call.1} parent=1 // pred_check
      _
    $region35: #{tpu_custom_call.1} parent=1 // pred_check_branch
      %95 = sbr.rel (0) target = $region37
    $region36: #{tpu_custom_call.1} parent=1 // pred_region
      %97 = vsyncadd [#allocation12], 0
      %s98 = sshll.u32 %s8, 4
      %s99 = int_to_ptr.hbm [resolvable:$true] %s98
      %s100 = sshll.u32 [#allocation11], 4
      %s101 = int_to_ptr.vmem [resolvable:$true] %s100
      %106 = dma.hbm_to_vmem [thread:$0]  %s99, 256, %s101, [#allocation12], 64, 64, 4
    $region37: #{tpu_custom_call.1} parent=1 // pred_fallthru
      _
    // Predicated region
    $region38: #{tpu_custom_call.1} parent=1 // pred_check
      _
    $region39: #{tpu_custom_call.1} parent=1 // pred_check_branch
      %108 = sbr.rel (0) target = $region41
    $region40: #{tpu_custom_call.1} parent=1 // pred_region
      _
    $region41: #{tpu_custom_call.1} parent=1 // pred_fallthru
      _
    // Predicated region
    $region42: #{tpu_custom_call.1} parent=1 // pred_check
      _
    $region43: #{tpu_custom_call.1} parent=1 // pred_check_branch
      %110 = sbr.rel (0) target = $region45
    $region44: #{tpu_custom_call.1} parent=1 // pred_region
      %112 = dma.done [#allocation3], 128
    $region45: #{tpu_custom_call.1} parent=1 // pred_fallthru
      _
    // Predicated region
    $region46: #{tpu_custom_call.1} parent=1 // pred_check
      _
    $region47: #{tpu_custom_call.1} parent=1 // pred_check_branch
      %114 = sbr.rel (0) target = $region49
    $region48: #{tpu_custom_call.1} parent=1 // pred_region
      %116 = dma.done [#allocation6], 128
    $region49: #{tpu_custom_call.1} parent=1 // pred_fallthru
      _
    // Predicated region
    $region50: #{tpu_custom_call.1} parent=1 // pred_check
      _
    $region51: #{tpu_custom_call.1} parent=1 // pred_check_branch
      %118 = sbr.rel (0) target = $region53
    $region52: #{tpu_custom_call.1} parent=1 // pred_region
      %120 = dma.done [#allocation6], 256
    $region53: #{tpu_custom_call.1} parent=1 // pred_fallthru
      _
    // Predicated region
    $region54: #{tpu_custom_call.1} parent=1 // pred_check
      _
    $region55: #{tpu_custom_call.1} parent=1 // pred_check_branch
      %122 = sbr.rel (0) target = $region57
    $region56: #{tpu_custom_call.1} parent=1 // pred_region
      %124 = dma.done [#allocation9], 128
    $region57: #{tpu_custom_call.1} parent=1 // pred_fallthru
      _
    // Predicated region
    $region58: #{tpu_custom_call.1} parent=1 // pred_check
      _
    $region59: #{tpu_custom_call.1} parent=1 // pred_check_branch
      %126 = sbr.rel (0) target = $region61
    $region60: #{tpu_custom_call.1} parent=1 // pred_region
      %128 = dma.done [#allocation9], 128
    $region61: #{tpu_custom_call.1} parent=1 // pred_fallthru
      _
    // Predicated region
    $region62: #{tpu_custom_call.1} parent=1 // pred_check
      _
    $region63: #{tpu_custom_call.1} parent=1 // pred_check_branch
      %130 = sbr.rel (0) target = $region65
    $region64: #{tpu_custom_call.1} parent=1 // pred_region
      %132 = dma.done [#allocation12], 256
    $region65: #{tpu_custom_call.1} parent=1 // pred_fallthru
      _
    %v134 = vld [vmem:[#allocation2] sm:$0xf]
    %v135 = vld [vmem:[#allocation2 + $0x4] sm:$0xf]
    %v136 = vld [vmem:[#allocation5] sm:$0xf]
    %v137 = vld [vmem:[#allocation5 + $0x4] sm:$0xf]
    %v138 = vld [vmem:[#allocation7] sm:$0xf]
    %v139 = vld [vmem:[#allocation7 + $0x4] sm:$0xf]
    %v140 = vld [vmem:[#allocation7 + $0x8] sm:$0xf]
    %v141 = vld [vmem:[#allocation7 + $0xc] sm:$0xf]
    %v142 = vld [vmem:[%s3] sm:$0x1]
    %v144 = vperm.slane %v142, 0
    %v148 = vunpack.c.l.b16 %v134
    %v149 = vunpack.c.l.b16 %v135
    %v150 = vpack.c.b16 %v149, %v148
    %v155 = vunpack.c.l.b16 %v138
    %v156 = vunpack.c.l.b16 %v139
    %v157 = vunpack.c.l.b16 %v140
    %v158 = vunpack.c.l.b16 %v141
    %v159 = vpack.c.b16 %v156, %v155
    %v160 = vpack.c.b16 %v158, %v157
    %vm163 = vcmask 261120
    %v165 = vsel %vm163, %v150, 0
    %167 = vmatpush.bf16.msra.mxu0 0
    %168 = vmatpush.bf16.msra.mxu0 0
    %169 = vmatpush.bf16.msra.mxu0 0
    %170 = vmatpush.bf16.msra.mxu0 0
    %171 = vmatpush.bf16.msra.mxu0 0
    %172 = vmatpush.bf16.msra.mxu0 0
    %173 = vmatpush.bf16.msra.mxu0 %v160
    %174 = vmatpush.bf16.msra.mxu0 %v159
    %175 = vmatmul.bf16.gmra.mxu0 %v165
    %v176 = vpop.f32.mrf.mxu0
    %v177 = vadd.f32 %v144, %v176
    %v178 = vpop.f32.mrf.mxu0
    %v179 = vadd.f32 %v144, %v178
    %180 = vdwg.mxu0
    %v181 = vld [vmem:[#allocation8] sm:$0xf]
    %v182 = vld [vmem:[#allocation8 + $0x4] sm:$0xf]
    %v183 = vld [vmem:[%s5] sm:$0x1]
    %v185 = vperm.slane %v183, 0
    %v189 = vunpack.c.l.b16 %v136
    %v190 = vunpack.c.l.b16 %v137
    %v191 = vpack.c.b16 %v190, %v189
    %v194 = vunpack.c.l.b16 %v181
    %v195 = vunpack.c.l.b16 %v182
    %v196 = vpack.c.b16 %v195, %v194
    %vm198 = vcmask 130048
    %v200 = vsel %vm198, %v191, 0
    %202 = vmatpush.bf16.msra.mxu0 0
    %203 = vmatpush.bf16.msra.mxu0 0
    %204 = vmatpush.bf16.msra.mxu0 0
    %205 = vmatpush.bf16.msra.mxu0 0
    %206 = vmatpush.bf16.msra.mxu0 0
    %207 = vmatpush.bf16.msra.mxu0 0
    %208 = vmatpush.bf16.msra.mxu0 0
    %209 = vmatpush.bf16.msra.mxu0 %v196
    %210 = vmatmul.bf16.gmra.mxu0 %v200
    %v211 = vpop.f32.mrf.mxu0
    %v212 = vadd.f32 %v185, %v211
    %v213 = vpop.f32.mrf.mxu0
    %v214 = vadd.f32 %v185, %v213
    %215 = vdwg.mxu0
    %v216 = vld [vmem:[#allocation10] sm:$0xf]
    %v217 = vld [vmem:[#allocation10 + $0x4] sm:$0xf]
    %v218 = vld [vmem:[%s7] sm:$0x1]
    %v220 = vperm.slane %v218, 0
    %v224 = vunpack.c.l.b16 %v216
    %v225 = vunpack.c.l.b16 %v217
    %v226 = vpack.c.b16 %v225, %v224
    %228 = vmatpush.bf16.msra.mxu0 0
    %229 = vmatpush.bf16.msra.mxu0 0
    %230 = vmatpush.bf16.msra.mxu0 0
    %231 = vmatpush.bf16.msra.mxu0 0
    %232 = vmatpush.bf16.msra.mxu0 0
    %233 = vmatpush.bf16.msra.mxu0 0
    %234 = vmatpush.bf16.msra.mxu0 0
    %235 = vmatpush.bf16.msra.mxu0 %v226
    %236 = vmatmul.bf16.gmra.mxu0 %v200
    %v237 = vpop.f32.mrf.mxu0
    %v238 = vadd.f32 %v220, %v237
    %v239 = vpop.f32.mrf.mxu0
    %v240 = vadd.f32 %v220, %v239
    %241 = vdwg.mxu0
    %244 = vrot.lane.b32.xlu0 %v177, 120
    %v245 = vpop.permute.xlu0 %244
    %246 = vrot.lane.b32.xlu0 %v179, 120
    %v247 = vpop.permute.xlu0 %246
    %250 = vrot.lane.b32.xlu0 %v177, 112
    %v251 = vpop.permute.xlu0 %250
    %252 = vrot.lane.b32.xlu0 %v179, 112
    %v253 = vpop.permute.xlu0 %252
    %256 = vrot.lane.b32.xlu0 %v177, 104
    %v257 = vpop.permute.xlu0 %256
    %258 = vrot.lane.b32.xlu0 %v179, 104
    %v259 = vpop.permute.xlu0 %258
    %v262 = vpack.c.bf16 %v177, %v177
    %v263 = vpack.c.bf16 %v245, %v245
    %v264 = vpack.c.bf16 %v251, %v251
    %v265 = vpack.c.bf16 %v257, %v257
    %v266 = vpack.c.bf16 %v179, %v179
    %v267 = vpack.c.bf16 %v247, %v247
    %v268 = vpack.c.bf16 %v253, %v253
    %v269 = vpack.c.bf16 %v259, %v259
    %272 = vrot.lane.b32.xlu0 %v212, 120
    %v273 = vpop.permute.xlu0 %272
    %274 = vrot.lane.b32.xlu0 %v214, 120
    %v275 = vpop.permute.xlu0 %274
    %278 = vrot.lane.b32.xlu0 %v212, 112
    %v279 = vpop.permute.xlu0 %278
    %280 = vrot.lane.b32.xlu0 %v214, 112
    %v281 = vpop.permute.xlu0 %280
    %284 = vrot.lane.b32.xlu0 %v212, 104
    %v285 = vpop.permute.xlu0 %284
    %286 = vrot.lane.b32.xlu0 %v214, 104
    %v287 = vpop.permute.xlu0 %286
    %v290 = vpack.c.bf16 %v212, %v212
    %v291 = vpack.c.bf16 %v273, %v273
    %v292 = vpack.c.bf16 %v279, %v279
    %v293 = vpack.c.bf16 %v285, %v285
    %v294 = vpack.c.bf16 %v214, %v214
    %v295 = vpack.c.bf16 %v275, %v275
    %v296 = vpack.c.bf16 %v281, %v281
    %v297 = vpack.c.bf16 %v287, %v287
    %300 = vrot.lane.b32.xlu0 %v238, 120
    %v301 = vpop.permute.xlu0 %300
    %302 = vrot.lane.b32.xlu0 %v240, 120
    %v303 = vpop.permute.xlu0 %302
    %306 = vrot.lane.b32.xlu0 %v238, 112
    %v307 = vpop.permute.xlu0 %306
    %308 = vrot.lane.b32.xlu0 %v240, 112
    %v309 = vpop.permute.xlu0 %308
    %312 = vrot.lane.b32.xlu0 %v238, 104
    %v313 = vpop.permute.xlu0 %312
    %314 = vrot.lane.b32.xlu0 %v240, 104
    %v315 = vpop.permute.xlu0 %314
    %v318 = vpack.c.bf16 %v238, %v238
    %v319 = vpack.c.bf16 %v301, %v301
    %v320 = vpack.c.bf16 %v307, %v307
    %v321 = vpack.c.bf16 %v313, %v313
    %v322 = vpack.c.bf16 %v240, %v240
    %v323 = vpack.c.bf16 %v303, %v303
    %v324 = vpack.c.bf16 %v309, %v309
    %v325 = vpack.c.bf16 %v315, %v315
    %vm326 = vcmask 64512
    %v328 = vsel %vm326, %v262, 0
    %v331 = vsel %vm326, %v290, 0
    %333 = vmatpush.bf16.xpose.msra.mxu0 0
    %334 = vmatpush.bf16.xpose.msra.mxu0 0
    %335 = vmatpush.bf16.xpose.msra.mxu0 0
    %336 = vmatpush.bf16.xpose.msra.mxu0 0
    %337 = vmatpush.bf16.xpose.msra.mxu0 0
    %338 = vmatpush.bf16.xpose.msra.mxu0 0
    %339 = vmatpush.bf16.xpose.msra.mxu0 0
    %340 = vmatpush.bf16.xpose.msra.mxu0 %v331
    %341 = vmatmul.bf16.gmra.mxu0 %v328
    %v342 = vpop.f32.mrf.mxu0
    %v343 = vadd.f32 0.0, %v342
    %v344 = vpop.f32.mrf.mxu0
    %345 = vdwg.mxu0
    %v347 = vsel %vm326, %v263, 0
    %v350 = vsel %vm326, %v291, 0
    %352 = vmatpush.bf16.xpose.msra.mxu0 0
    %353 = vmatpush.bf16.xpose.msra.mxu0 0
    %354 = vmatpush.bf16.xpose.msra.mxu0 0
    %355 = vmatpush.bf16.xpose.msra.mxu0 0
    %356 = vmatpush.bf16.xpose.msra.mxu0 0
    %357 = vmatpush.bf16.xpose.msra.mxu0 0
    %358 = vmatpush.bf16.xpose.msra.mxu0 0
    %359 = vmatpush.bf16.xpose.msra.mxu0 %v350
    %360 = vmatmul.bf16.gmra.mxu0 %v347
    %v361 = vpop.f32.mrf.mxu0
    %v362 = vadd.f32 0.0, %v361
    %v363 = vpop.f32.mrf.mxu0
    %364 = vdwg.mxu0
    %v366 = vsel %vm326, %v264, 0
    %v369 = vsel %vm326, %v292, 0
    %371 = vmatpush.bf16.xpose.msra.mxu0 0
    %372 = vmatpush.bf16.xpose.msra.mxu0 0
    %373 = vmatpush.bf16.xpose.msra.mxu0 0
    %374 = vmatpush.bf16.xpose.msra.mxu0 0
    %375 = vmatpush.bf16.xpose.msra.mxu0 0
    %376 = vmatpush.bf16.xpose.msra.mxu0 0
    %377 = vmatpush.bf16.xpose.msra.mxu0 0
    %378 = vmatpush.bf16.xpose.msra.mxu0 %v369
    %379 = vmatmul.bf16.gmra.mxu0 %v366
    %v380 = vpop.f32.mrf.mxu0
    %v381 = vadd.f32 0.0, %v380
    %v382 = vpop.f32.mrf.mxu0
    %383 = vdwg.mxu0
    %v385 = vsel %vm326, %v265, 0
    %v388 = vsel %vm326, %v293, 0
    %390 = vmatpush.bf16.xpose.msra.mxu0 0
    %391 = vmatpush.bf16.xpose.msra.mxu0 0
    %392 = vmatpush.bf16.xpose.msra.mxu0 0
    %393 = vmatpush.bf16.xpose.msra.mxu0 0
    %394 = vmatpush.bf16.xpose.msra.mxu0 0
    %395 = vmatpush.bf16.xpose.msra.mxu0 0
    %396 = vmatpush.bf16.xpose.msra.mxu0 0
    %397 = vmatpush.bf16.xpose.msra.mxu0 %v388
    %398 = vmatmul.bf16.gmra.mxu0 %v385
    %v399 = vpop.f32.mrf.mxu0
    %v400 = vadd.f32 0.0, %v399
    %v401 = vpop.f32.mrf.mxu0
    %402 = vdwg.mxu0
    %v404 = vsel %vm326, %v266, 0
    %v407 = vsel %vm326, %v294, 0
    %409 = vmatpush.bf16.xpose.msra.mxu0 0
    %410 = vmatpush.bf16.xpose.msra.mxu0 0
    %411 = vmatpush.bf16.xpose.msra.mxu0 0
    %412 = vmatpush.bf16.xpose.msra.mxu0 0
    %413 = vmatpush.bf16.xpose.msra.mxu0 0
    %414 = vmatpush.bf16.xpose.msra.mxu0 0
    %415 = vmatpush.bf16.xpose.msra.mxu0 0
    %416 = vmatpush.bf16.xpose.msra.mxu0 %v407
    %417 = vmatmul.bf16.gmra.mxu0 %v404
    %v418 = vpop.f32.mrf.mxu0
    %v419 = vadd.f32 0.0, %v418
    %v420 = vpop.f32.mrf.mxu0
    %421 = vdwg.mxu0
    %v423 = vsel %vm326, %v267, 0
    %v426 = vsel %vm326, %v295, 0
    %428 = vmatpush.bf16.xpose.msra.mxu0 0
    %429 = vmatpush.bf16.xpose.msra.mxu0 0
    %430 = vmatpush.bf16.xpose.msra.mxu0 0
    %431 = vmatpush.bf16.xpose.msra.mxu0 0
    %432 = vmatpush.bf16.xpose.msra.mxu0 0
    %433 = vmatpush.bf16.xpose.msra.mxu0 0
    %434 = vmatpush.bf16.xpose.msra.mxu0 0
    %435 = vmatpush.bf16.xpose.msra.mxu0 %v426
    %436 = vmatmul.bf16.gmra.mxu0 %v423
    %v437 = vpop.f32.mrf.mxu0
    %v438 = vadd.f32 0.0, %v437
    %v439 = vpop.f32.mrf.mxu0
    %440 = vdwg.mxu0
    %v442 = vsel %vm326, %v268, 0
    %v445 = vsel %vm326, %v296, 0
    %447 = vmatpush.bf16.xpose.msra.mxu0 0
    %448 = vmatpush.bf16.xpose.msra.mxu0 0
    %449 = vmatpush.bf16.xpose.msra.mxu0 0
    %450 = vmatpush.bf16.xpose.msra.mxu0 0
    %451 = vmatpush.bf16.xpose.msra.mxu0 0
    %452 = vmatpush.bf16.xpose.msra.mxu0 0
    %453 = vmatpush.bf16.xpose.msra.mxu0 0
    %454 = vmatpush.bf16.xpose.msra.mxu0 %v445
    %455 = vmatmul.bf16.gmra.mxu0 %v442
    %v456 = vpop.f32.mrf.mxu0
    %v457 = vadd.f32 0.0, %v456
    %v458 = vpop.f32.mrf.mxu0
    %459 = vdwg.mxu0
    %v461 = vsel %vm326, %v269, 0
    %v464 = vsel %vm326, %v297, 0
    %466 = vmatpush.bf16.xpose.msra.mxu0 0
    %467 = vmatpush.bf16.xpose.msra.mxu0 0
    %468 = vmatpush.bf16.xpose.msra.mxu0 0
    %469 = vmatpush.bf16.xpose.msra.mxu0 0
    %470 = vmatpush.bf16.xpose.msra.mxu0 0
    %471 = vmatpush.bf16.xpose.msra.mxu0 0
    %472 = vmatpush.bf16.xpose.msra.mxu0 0
    %473 = vmatpush.bf16.xpose.msra.mxu0 %v464
    %474 = vmatmul.bf16.gmra.mxu0 %v461
    %v475 = vpop.f32.mrf.mxu0
    %v476 = vadd.f32 0.0, %v475
    %v477 = vpop.f32.mrf.mxu0
    %478 = vdwg.mxu0
    %v479 = vmul.f32 %v343, 0.35355338
    %v480 = vmul.f32 %v362, 0.35355338
    %v481 = vmul.f32 %v381, 0.35355338
    %v482 = vmul.f32 %v400, 0.35355338
    %v483 = vmul.f32 %v419, 0.35355338
    %v484 = vmul.f32 %v438, 0.35355338
    %v485 = vmul.f32 %v457, 0.35355338
    %v486 = vmul.f32 %v476, 0.35355338
    %v487 = vsel %vm326, %v479, -inf
    %488 = vmax.xlane.f32.xlu0 %v487
    %v489 = vpop.xlane.xlu0 %488
    %v490 = vsel %vm326, %v480, -inf
    %491 = vmax.xlane.f32.xlu0 %v490
    %v492 = vpop.xlane.xlu0 %491
    %v493 = vsel %vm326, %v481, -inf
    %494 = vmax.xlane.f32.xlu0 %v493
    %v495 = vpop.xlane.xlu0 %494
    %v496 = vsel %vm326, %v482, -inf
    %497 = vmax.xlane.f32.xlu0 %v496
    %v498 = vpop.xlane.xlu0 %497
    %v499 = vsel %vm326, %v483, -inf
    %500 = vmax.xlane.f32.xlu0 %v499
    %v501 = vpop.xlane.xlu0 %500
    %v502 = vsel %vm326, %v484, -inf
    %503 = vmax.xlane.f32.xlu0 %v502
    %v504 = vpop.xlane.xlu0 %503
    %v505 = vsel %vm326, %v485, -inf
    %506 = vmax.xlane.f32.xlu0 %v505
    %v507 = vpop.xlane.xlu0 %506
    %v508 = vsel %vm326, %v486, -inf
    %509 = vmax.xlane.f32.xlu0 %v508
    %v510 = vpop.xlane.xlu0 %509
    %v511 = vsub.f32 %v479, %v489
    %v512 = vsub.f32 %v480, %v492
    %v513 = vsub.f32 %v481, %v495
    %v514 = vsub.f32 %v482, %v498
    %v515 = vsub.f32 %v483, %v501
    %v516 = vsub.f32 %v484, %v504
    %v517 = vsub.f32 %v485, %v507
    %v518 = vsub.f32 %v486, %v510
    %v519 = vmul.f32 %v511, 1.442695
    %v520 = vpow.pop %v519
    %v521 = vmul.f32 %v512, 1.442695
    %v522 = vpow.pop %v521
    %v523 = vmul.f32 %v513, 1.442695
    %v524 = vpow.pop %v523
    %v525 = vmul.f32 %v514, 1.442695
    %v526 = vpow.pop %v525
    %v527 = vmul.f32 %v515, 1.442695
    %v528 = vpow.pop %v527
    %v529 = vmul.f32 %v516, 1.442695
    %v530 = vpow.pop %v529
    %v531 = vmul.f32 %v517, 1.442695
    %v532 = vpow.pop %v531
    %v533 = vmul.f32 %v518, 1.442695
    %v534 = vpow.pop %v533
    %v535 = vsel %vm326, %v520, 0.0
    %536 = vadd.xlane.f32.xlu0 %v535
    %v537 = vpop.xlane.xlu0 %536
    %v538 = vsel %vm326, %v522, 0.0
    %539 = vadd.xlane.f32.xlu0 %v538
    %v540 = vpop.xlane.xlu0 %539
    %v541 = vsel %vm326, %v524, 0.0
    %542 = vadd.xlane.f32.xlu0 %v541
    %v543 = vpop.xlane.xlu0 %542
    %v544 = vsel %vm326, %v526, 0.0
    %545 = vadd.xlane.f32.xlu0 %v544
    %v546 = vpop.xlane.xlu0 %545
    %v547 = vsel %vm326, %v528, 0.0
    %548 = vadd.xlane.f32.xlu0 %v547
    %v549 = vpop.xlane.xlu0 %548
    %v550 = vsel %vm326, %v530, 0.0
    %551 = vadd.xlane.f32.xlu0 %v550
    %v552 = vpop.xlane.xlu0 %551
    %v553 = vsel %vm326, %v532, 0.0
    %554 = vadd.xlane.f32.xlu0 %v553
    %v555 = vpop.xlane.xlu0 %554
    %v556 = vsel %vm326, %v534, 0.0
    %557 = vadd.xlane.f32.xlu0 %v556
    %v558 = vpop.xlane.xlu0 %557
    %v559 = vrcp.pop %v537
    %v560 = vrcp.pop %v540
    %v561 = vrcp.pop %v543
    %v562 = vrcp.pop %v546
    %v563 = vrcp.pop %v549
    %v564 = vrcp.pop %v552
    %v565 = vrcp.pop %v555
    %v566 = vrcp.pop %v558
    %v567 = vmul.f32 %v520, %v559
    %v568 = vmul.f32 %v522, %v560
    %v569 = vmul.f32 %v524, %v561
    %v570 = vmul.f32 %v526, %v562
    %v571 = vmul.f32 %v528, %v563
    %v572 = vmul.f32 %v530, %v564
    %v573 = vmul.f32 %v532, %v565
    %v574 = vmul.f32 %v534, %v566
    %v575 = vpack.c.bf16 %v567, %v567
    %v576 = vpack.c.bf16 %v568, %v568
    %v577 = vpack.c.bf16 %v569, %v569
    %v578 = vpack.c.bf16 %v570, %v570
    %v579 = vpack.c.bf16 %v571, %v571
    %v580 = vpack.c.bf16 %v572, %v572
    %v581 = vpack.c.bf16 %v573, %v573
    %v582 = vpack.c.bf16 %v574, %v574
    %v584 = vsel %vm326, %v575, 0
    %vm586 = vcmask 1043456
    %v588 = vsel %vm586, %v318, 0
    %590 = vmatpush.bf16.msra.mxu0 0
    %591 = vmatpush.bf16.msra.mxu0 0
    %592 = vmatpush.bf16.msra.mxu0 0
    %593 = vmatpush.bf16.msra.mxu0 0
    %594 = vmatpush.bf16.msra.mxu0 0
    %595 = vmatpush.bf16.msra.mxu0 0
    %596 = vmatpush.bf16.msra.mxu0 0
    %597 = vmatpush.bf16.msra.mxu0 %v588
    %598 = vmatmul.bf16.gmra.mxu0 %v584
    %v599 = vpop.f32.mrf.mxu0
    %v600 = vadd.f32 0.0, %v599
    %v601 = vpop.f32.mrf.mxu0
    %602 = vdwg.mxu0
    %v604 = vsel %vm326, %v576, 0
    %v607 = vsel %vm586, %v319, 0
    %609 = vmatpush.bf16.msra.mxu0 0
    %610 = vmatpush.bf16.msra.mxu0 0
    %611 = vmatpush.bf16.msra.mxu0 0
    %612 = vmatpush.bf16.msra.mxu0 0
    %613 = vmatpush.bf16.msra.mxu0 0
    %614 = vmatpush.bf16.msra.mxu0 0
    %615 = vmatpush.bf16.msra.mxu0 0
    %616 = vmatpush.bf16.msra.mxu0 %v607
    %617 = vmatmul.bf16.gmra.mxu0 %v604
    %v618 = vpop.f32.mrf.mxu0
    %v619 = vadd.f32 0.0, %v618
    %v620 = vpop.f32.mrf.mxu0
    %621 = vdwg.mxu0
    %v623 = vsel %vm326, %v577, 0
    %v626 = vsel %vm586, %v320, 0
    %628 = vmatpush.bf16.msra.mxu0 0
    %629 = vmatpush.bf16.msra.mxu0 0
    %630 = vmatpush.bf16.msra.mxu0 0
    %631 = vmatpush.bf16.msra.mxu0 0
    %632 = vmatpush.bf16.msra.mxu0 0
    %633 = vmatpush.bf16.msra.mxu0 0
    %634 = vmatpush.bf16.msra.mxu0 0
    %635 = vmatpush.bf16.msra.mxu0 %v626
    %636 = vmatmul.bf16.gmra.mxu0 %v623
    %v637 = vpop.f32.mrf.mxu0
    %v638 = vadd.f32 0.0, %v637
    %v639 = vpop.f32.mrf.mxu0
    %640 = vdwg.mxu0
    %v642 = vsel %vm326, %v578, 0
    %v645 = vsel %vm586, %v321, 0
    %647 = vmatpush.bf16.msra.mxu0 0
    %648 = vmatpush.bf16.msra.mxu0 0
    %649 = vmatpush.bf16.msra.mxu0 0
    %650 = vmatpush.bf16.msra.mxu0 0
    %651 = vmatpush.bf16.msra.mxu0 0
    %652 = vmatpush.bf16.msra.mxu0 0
    %653 = vmatpush.bf16.msra.mxu0 0
    %654 = vmatpush.bf16.msra.mxu0 %v645
    %655 = vmatmul.bf16.gmra.mxu0 %v642
    %v656 = vpop.f32.mrf.mxu0
    %v657 = vadd.f32 0.0, %v656
    %v658 = vpop.f32.mrf.mxu0
    %659 = vdwg.mxu0
    %v661 = vsel %vm326, %v579, 0
    %v664 = vsel %vm586, %v322, 0
    %666 = vmatpush.bf16.msra.mxu0 0
    %667 = vmatpush.bf16.msra.mxu0 0
    %668 = vmatpush.bf16.msra.mxu0 0
    %669 = vmatpush.bf16.msra.mxu0 0
    %670 = vmatpush.bf16.msra.mxu0 0
    %671 = vmatpush.bf16.msra.mxu0 0
    %672 = vmatpush.bf16.msra.mxu0 0
    %673 = vmatpush.bf16.msra.mxu0 %v664
    %674 = vmatmul.bf16.gmra.mxu0 %v661
    %v675 = vpop.f32.mrf.mxu0
    %v676 = vadd.f32 0.0, %v675
    %v677 = vpop.f32.mrf.mxu0
    %678 = vdwg.mxu0
    %v680 = vsel %vm326, %v580, 0
    %v683 = vsel %vm586, %v323, 0
    %685 = vmatpush.bf16.msra.mxu0 0
    %686 = vmatpush.bf16.msra.mxu0 0
    %687 = vmatpush.bf16.msra.mxu0 0
    %688 = vmatpush.bf16.msra.mxu0 0
    %689 = vmatpush.bf16.msra.mxu0 0
    %690 = vmatpush.bf16.msra.mxu0 0
    %691 = vmatpush.bf16.msra.mxu0 0
    %692 = vmatpush.bf16.msra.mxu0 %v683
    %693 = vmatmul.bf16.gmra.mxu0 %v680
    %v694 = vpop.f32.mrf.mxu0
    %v695 = vadd.f32 0.0, %v694
    %v696 = vpop.f32.mrf.mxu0
    %697 = vdwg.mxu0
    %v699 = vsel %vm326, %v581, 0
    %v702 = vsel %vm586, %v324, 0
    %704 = vmatpush.bf16.msra.mxu0 0
    %705 = vmatpush.bf16.msra.mxu0 0
    %706 = vmatpush.bf16.msra.mxu0 0
    %707 = vmatpush.bf16.msra.mxu0 0
    %708 = vmatpush.bf16.msra.mxu0 0
    %709 = vmatpush.bf16.msra.mxu0 0
    %710 = vmatpush.bf16.msra.mxu0 0
    %711 = vmatpush.bf16.msra.mxu0 %v702
    %712 = vmatmul.bf16.gmra.mxu0 %v699
    %v713 = vpop.f32.mrf.mxu0
    %v714 = vadd.f32 0.0, %v713
    %v715 = vpop.f32.mrf.mxu0
    %716 = vdwg.mxu0
    %v718 = vsel %vm326, %v582, 0
    %v721 = vsel %vm586, %v325, 0
    %723 = vmatpush.bf16.msra.mxu0 0
    %724 = vmatpush.bf16.msra.mxu0 0
    %725 = vmatpush.bf16.msra.mxu0 0
    %726 = vmatpush.bf16.msra.mxu0 0
    %727 = vmatpush.bf16.msra.mxu0 0
    %728 = vmatpush.bf16.msra.mxu0 0
    %729 = vmatpush.bf16.msra.mxu0 0
    %730 = vmatpush.bf16.msra.mxu0 %v721
    %731 = vmatmul.bf16.gmra.mxu0 %v718
    %v732 = vpop.f32.mrf.mxu0
    %v733 = vadd.f32 0.0, %v732
    %v734 = vpop.f32.mrf.mxu0
    %735 = vdwg.mxu0
    %738 = vrot.lane.b32.xlu0 %v619, 8
    %v739 = vpop.permute.xlu0 %738
    %740 = vrot.lane.b32.xlu0 %v695, 8
    %v741 = vpop.permute.xlu0 %740
    %746 = vrot.lane.b32.xlu0 %v638, 16
    %v747 = vpop.permute.xlu0 %746
    %748 = vrot.lane.b32.xlu0 %v714, 16
    %v749 = vpop.permute.xlu0 %748
    %754 = vrot.lane.b32.xlu0 %v657, 24
    %v755 = vpop.permute.xlu0 %754
    %756 = vrot.lane.b32.xlu0 %v733, 24
    %v757 = vpop.permute.xlu0 %756
    %v760 = vsel %vm326, %v600, %v739
    %v761 = vsel %vm326, %v676, %v741
    %v762 = vsel %vm198, %v760, %v747
    %v763 = vsel %vm198, %v761, %v749
    %vm764 = vcmask 195584
    %v765 = vsel %vm764, %v762, %v755
    %v766 = vsel %vm764, %v763, %v757
    %v767 = vpack.c.bf16 %v766, %v765
    %v768 = vld [vmem:[#allocation11] sm:$0xf]
    %v769 = vld [vmem:[#allocation11 + $0x4] sm:$0xf]
    %v770 = vld [vmem:[#allocation11 + $0x8] sm:$0xf]
    %v771 = vld [vmem:[#allocation11 + $0xc] sm:$0xf]
    %v772 = vld [vmem:[%s9] sm:$0x1]
    %v774 = vperm.slane %v772, 0
    %v780 = vunpack.c.l.b16 %v768
    %v781 = vunpack.c.l.b16 %v769
    %v782 = vunpack.c.l.b16 %v770
    %v783 = vunpack.c.l.b16 %v771
    %v784 = vpack.c.b16 %v781, %v780
    %v785 = vpack.c.b16 %v783, %v782
    %v789 = vsel %vm163, %v767, 0
    %791 = vmatpush.bf16.msra.mxu0 0
    %792 = vmatpush.bf16.msra.mxu0 0
    %793 = vmatpush.bf16.msra.mxu0 0
    %794 = vmatpush.bf16.msra.mxu0 0
    %795 = vmatpush.bf16.msra.mxu0 0
    %796 = vmatpush.bf16.msra.mxu0 0
    %797 = vmatpush.bf16.msra.mxu0 %v785
    %798 = vmatpush.bf16.msra.mxu0 %v784
    %799 = vmatmul.bf16.gmra.mxu0 %v789
    %v800 = vpop.f32.mrf.mxu0
    %v801 = vadd.f32 %v774, %v800
    %v802 = vpop.f32.mrf.mxu0
    %v803 = vadd.f32 %v774, %v802
    %804 = vdwg.mxu0
    %v805 = vsel %vm326, %v567, 0.0
    %v806 = vsel %vm326, %v568, 0.0
    %v807 = vadd.f32 %v805, %v806
    %v808 = vsel %vm326, %v569, 0.0
    %v809 = vadd.f32 %v807, %v808
    %v810 = vsel %vm326, %v570, 0.0
    %v811 = vadd.f32 %v809, %v810
    %v812 = vsel %vm326, %v571, 0.0
    %v813 = vsel %vm326, %v572, 0.0
    %v814 = vadd.f32 %v812, %v813
    %v815 = vsel %vm326, %v573, 0.0
    %v816 = vadd.f32 %v814, %v815
    %v817 = vsel %vm326, %v574, 0.0
    %v818 = vadd.f32 %v816, %v817
    %v819 = vrcp.pop 4.0
    %v820 = vmul.f32 4.0, %v819
    %v821 = vsub.f32 1.0, %v820
    %v822 = vmul.f32 %v819, %v821
    %v823 = vadd.f32 %v819, %v822
    %vm824 = vweird.f32 %v819
    %v825 = vsel %vm824, %v819, %v823
    %v826 = vmul.f32 %v811, %v825
    %v827 = vmul.f32 %v818, %v825
    %v829 = vrot.slane %v801, 4
    %830 = vrot.lane.b32.xlu0 %v829, 32
    %v831 = vpop.permute.xlu0 %830
    %834 = vrot.lane.b32.xlu0 %v803, 64
    %v835 = vpop.permute.xlu0 %834
    %v837 = vrot.slane %v803, 4
    %838 = vrot.lane.b32.xlu0 %v837, 96
    %v839 = vpop.permute.xlu0 %838
    %v841 = vsel %vm163, %v801, %v831
    %vm842 = vcmask 523264
    %v843 = vsel %vm842, %v841, %v835
    %vm844 = vcmask 785408
    %v845 = vsel %vm844, %v843, %v839
    %846 = vst [vmem:[#allocation13] sm:$0xf] %v845
    %v848 = vrot.slane %v826, 1
    %849 = vrot.lane.b32.xlu0 %v848, 8
    %v850 = vpop.permute.xlu0 %849
    %v852 = vrot.slane %v826, 2
    %853 = vrot.lane.b32.xlu0 %v852, 16
    %v854 = vpop.permute.xlu0 %853
    %v856 = vrot.slane %v826, 3
    %857 = vrot.lane.b32.xlu0 %v856, 24
    %v858 = vpop.permute.xlu0 %857
    %v860 = vrot.slane %v826, 4
    %861 = vrot.lane.b32.xlu0 %v860, 32
    %v862 = vpop.permute.xlu0 %861
    %v864 = vrot.slane %v826, 5
    %865 = vrot.lane.b32.xlu0 %v864, 40
    %v866 = vpop.permute.xlu0 %865
    %v868 = vrot.slane %v826, 6
    %869 = vrot.lane.b32.xlu0 %v868, 48
    %v870 = vpop.permute.xlu0 %869
    %v872 = vrot.slane %v826, 7
    %873 = vrot.lane.b32.xlu0 %v872, 56
    %v874 = vpop.permute.xlu0 %873
    %877 = vrot.lane.b32.xlu0 %v827, 64
    %v878 = vpop.permute.xlu0 %877
    %v880 = vrot.slane %v827, 1
    %881 = vrot.lane.b32.xlu0 %v880, 72
    %v882 = vpop.permute.xlu0 %881
    %v884 = vrot.slane %v827, 2
    %885 = vrot.lane.b32.xlu0 %v884, 80
    %v886 = vpop.permute.xlu0 %885
    %v888 = vrot.slane %v827, 3
    %889 = vrot.lane.b32.xlu0 %v888, 88
    %v890 = vpop.permute.xlu0 %889
    %v892 = vrot.slane %v827, 4
    %893 = vrot.lane.b32.xlu0 %v892, 96
    %v894 = vpop.permute.xlu0 %893
    %v896 = vrot.slane %v827, 5
    %897 = vrot.lane.b32.xlu0 %v896, 104
    %v898 = vpop.permute.xlu0 %897
    %v900 = vrot.slane %v827, 6
    %901 = vrot.lane.b32.xlu0 %v900, 112
    %v902 = vpop.permute.xlu0 %901
    %v904 = vrot.slane %v827, 7
    %905 = vrot.lane.b32.xlu0 %v904, 120
    %v906 = vpop.permute.xlu0 %905
    %v908 = vsel %vm326, %v826, %v850
    %v909 = vsel %vm198, %v908, %v854
    %v910 = vsel %vm764, %v909, %v858
    %v911 = vsel %vm163, %v910, %v862
    %vm912 = vcmask 326656
    %v913 = vsel %vm912, %v911, %v866
    %vm914 = vcmask 392192
    %v915 = vsel %vm914, %v913, %v870
    %vm916 = vcmask 457728
    %v917 = vsel %vm916, %v915, %v874
    %v918 = vsel %vm842, %v917, %v878
    %vm919 = vcmask 588800
    %v920 = vsel %vm919, %v918, %v882
    %vm921 = vcmask 654336
    %v922 = vsel %vm921, %v920, %v886
    %vm923 = vcmask 719872
    %v924 = vsel %vm923, %v922, %v890
    %v925 = vsel %vm844, %v924, %v894
    %vm926 = vcmask 850944
    %v927 = vsel %vm926, %v925, %v898
    %vm928 = vcmask 916480
    %v929 = vsel %vm928, %v927, %v902
    %vm930 = vcmask 982016
    %v931 = vsel %vm930, %v929, %v906
    %932 = vst [vmem:[#allocation14] sm:$0x1] %v931
    // Predicated region
    $region66: #{tpu_custom_call.1} parent=1 // pred_check
      _
    $region67: #{tpu_custom_call.1} parent=1 // pred_check_branch
      %934 = sbr.rel (0) target = $region69
    $region68: #{tpu_custom_call.1} parent=1 // pred_region
      %936 = vsyncadd [#allocation4], 0
      %s938 = sshll.u32 [#allocation13], 4
      %s939 = int_to_ptr.vmem [resolvable:$true] %s938
      %s940 = sshll.u32 %s10, 4
      %s941 = int_to_ptr.hbm [resolvable:$true] %s940
      %943 = dma.vmem_to_hbm [thread:$0]  %s939, 64, %s941, [#allocation4]
    $region69: #{tpu_custom_call.1} parent=1 // pred_fallthru
      _
    // Predicated region
    $region70: #{tpu_custom_call.1} parent=1 // pred_check
      _
    $region71: #{tpu_custom_call.1} parent=1 // pred_check_branch
      %945 = sbr.rel (0) target = $region73
    $region72: #{tpu_custom_call.1} parent=1 // pred_region
      %947 = vsyncadd [#allocation15], 0
      %s949 = sshll.u32 [#allocation14], 4
      %s950 = int_to_ptr.vmem [resolvable:$true] %s949
      %s951 = sshll.u32 %s11, 4
      %s952 = int_to_ptr.hbm [resolvable:$true] %s951
      %954 = dma.vmem_to_hbm [thread:$0]  %s950, 16, %s952, [#allocation15]
    $region73: #{tpu_custom_call.1} parent=1 // pred_fallthru
      _
    // Predicated region
    $region74: #{tpu_custom_call.1} parent=1 // pred_check
      _
    $region75: #{tpu_custom_call.1} parent=1 // pred_check_branch
      %956 = sbr.rel (0) target = $region77
    $region76: #{tpu_custom_call.1} parent=1 // pred_region
      %958 = dma.done [#allocation4], 64
    $region77: #{tpu_custom_call.1} parent=1 // pred_fallthru
      _
    // Predicated region
    $region78: #{tpu_custom_call.1} parent=1 // pred_check
      _
    $region79: #{tpu_custom_call.1} parent=1 // pred_check_branch
      %960 = sbr.rel (0) target = $region81
    $region80: #{tpu_custom_call.1} parent=1 // pred_region
      %962 = dma.done [#allocation15], 16
    $region81: #{tpu_custom_call.1} parent=1 // pred_fallthru
      _
    %963 = vsyncpa [#allocation3], 1
    %964 = vsyncpa [#allocation6], 1
    %965 = vsyncpa [#allocation9], 1
    %966 = vsyncpa [#allocation12], 1
    %967 = vsyncpa [#allocation4], 1
    %968 = vsyncpa [#allocation15], 1

// kernel: tpu_custom_call.1
$region0: #{tpu_custom_call.1}
  #allocation0 [shape = 'u32[]', space=smem, size = 0x4, offset = 0x4, fixed_abs, tag = 'smem constant byte address 0x4 - core index']
  #allocation1 [shape = 'u32[72,128]{1,0:T(1,128)}', space=vmem, size = 0x9000, scoped, tag = 'internal scratch']
  %s0 = inlined_call_operand.hbm [shape: bf16[16,32], index: 0, kind: input, shape index: {}]
  %s1 = inlined_call_operand.hbm [shape: bf16[16,16], index: 1, kind: input, shape index: {}]
  %s2 = inlined_call_operand.hbm [shape: bf16[32,32], index: 2, kind: input, shape index: {}]
  %s3 = inlined_call_operand.vmem [shape: f32[1,32], index: 3, kind: input, shape index: {}]
  %s4 = inlined_call_operand.hbm [shape: bf16[16,32], index: 4, kind: input, shape index: {}]
  %s5 = inlined_call_operand.vmem [shape: f32[1,32], index: 5, kind: input, shape index: {}]
  %s6 = inlined_call_operand.hbm [shape: bf16[16,32], index: 6, kind: input, shape index: {}]
  %s7 = inlined_call_operand.vmem [shape: f32[1,32], index: 7, kind: input, shape index: {}]
  %s8 = inlined_call_operand.hbm [shape: bf16[32,32], index: 8, kind: input, shape index: {}]
  %s9 = inlined_call_operand.vmem [shape: f32[1,32], index: 9, kind: input, shape index: {}]
  %s10 = inlined_call_operand.hbm [shape: f32[4,128], index: 10, kind: output, shape index: {0}]
  %s11 = inlined_call_operand.hbm [shape: f32[1,128], index: 11, kind: output, shape index: {1}]
  %12 = xla_tuple %s10, %s11
  %s13 = sld [smem:[#allocation0]]
  $region82: #{tpu_custom_call.1} parent=0
    _
  %s15 = ssub.s32 1, %s13
  %s16 = scalar_select 0, %s15, %s13
  $region1: #{tpu_custom_call.1} parent=0
    #allocation2 [shape = 'u8[4096]{0}', space=vmem, size = 0x1000, scoped, tag = 'input window, operand 0, single buffered']
    #allocation3 [shape = 's32[1]{0}', space=sflag, size = 0x4, scoped, tag = 'scoped memory for tpu_custom_call.1']
    #allocation4 [shape = 's32[1]{0}', space=sflag, size = 0x4, scoped, tag = 'scoped memory for tpu_custom_call.1']
    #allocation5 [shape = 'u8[4096]{0}', space=vmem, size = 0x1000, scoped, tag = 'input window, operand 1, single buffered']
    #allocation6 [shape = 's32[1]{0}', space=sflag, size = 0x4, scoped, tag = 'scoped memory for tpu_custom_call.1']
    #allocation7 [shape = 'u8[8192]{0}', space=vmem, size = 0x2000, scoped, tag = 'input window, operand 2, single buffered']
    #allocation8 [shape = 'u8[4096]{0}', space=vmem, size = 0x1000, scoped, tag = 'input window, operand 4, single buffered']
    #allocation9 [shape = 's32[1]{0}', space=sflag, size = 0x4, scoped, tag = 'scoped memory for tpu_custom_call.1']
    #allocation10 [shape = 'u8[4096]{0}', space=vmem, size = 0x1000, scoped, tag = 'input window, operand 6, single buffered']
    #allocation11 [shape = 'u8[8192]{0}', space=vmem, size = 0x2000, scoped, tag = 'input window, operand 8, single buffered']
    #allocation12 [shape = 's32[1]{0}', space=sflag, size = 0x4, scoped, tag = 'scoped memory for tpu_custom_call.1']
    #allocation13 [shape = 'u8[2048]{0}', space=vmem, size = 0x800, scoped, tag = 'output window, operand 0, single buffered']
    #allocation14 [shape = 'u8[512]{0}', space=vmem, size = 0x400, scoped, tag = 'output window, operand 1, single buffered']
    #allocation15 [shape = 's32[1]{0}', space=sflag, size = 0x4, scoped, tag = 'scoped memory for tpu_custom_call.1']
    %17 = vsyncpa [#allocation3], 0
    %18 = vsyncpa [#allocation6], 0
    %19 = vsyncpa [#allocation9], 0
    %20 = vsyncpa [#allocation12], 0
    %21 = vsyncpa [#allocation4], 0
    %22 = vsyncpa [#allocation15], 0
    // Predicated region
    $region2: #{tpu_custom_call.1} parent=1 // pred_check
      _
    $region3: #{tpu_custom_call.1} parent=1 // pred_check_branch
      %24 = sbr.rel (0) target = $region5
    $region4: #{tpu_custom_call.1} parent=1 // pred_region
      %26 = vsyncadd [#allocation3], 0
      %s27 = sshll.u32 %s0, 4
      %s28 = int_to_ptr.hbm [resolvable:$true] %s27
      %s29 = sshll.u32 [#allocation2], 4
      %s30 = int_to_ptr.vmem [resolvable:$true] %s29
      %35 = dma.hbm_to_vmem [thread:$0]  %s28, 128, %s30, [#allocation3], 64, 64, 4
    $region5: #{tpu_custom_call.1} parent=1 // pred_fallthru
      _
    // Predicated region
    $region6: #{tpu_custom_call.1} parent=1 // pred_check
      _
    $region7: #{tpu_custom_call.1} parent=1 // pred_check_branch
      %37 = sbr.rel (0) target = $region9
    $region8: #{tpu_custom_call.1} parent=1 // pred_region
      %39 = vsyncadd [#allocation6], 0
      %s40 = sshll.u32 %s1, 4
      %s41 = int_to_ptr.hbm [resolvable:$true] %s40
      %s42 = sshll.u32 [#allocation5], 4
      %s43 = int_to_ptr.vmem [resolvable:$true] %s42
      %48 = dma.hbm_to_vmem [thread:$0]  %s41, 128, %s43, [#allocation6], 64, 64, 4
    $region9: #{tpu_custom_call.1} parent=1 // pred_fallthru
      _
    // Predicated region
    $region10: #{tpu_custom_call.1} parent=1 // pred_check
      _
    $region11: #{tpu_custom_call.1} parent=1 // pred_check_branch
      %50 = sbr.rel (0) target = $region13
    $region12: #{tpu_custom_call.1} parent=1 // pred_region
      %52 = vsyncadd [#allocation6], 0
      %s53 = sshll.u32 %s2, 4
      %s54 = int_to_ptr.hbm [resolvable:$true] %s53
      %s55 = sshll.u32 [#allocation7], 4
      %s56 = int_to_ptr.vmem [resolvable:$true] %s55
      %61 = dma.hbm_to_vmem [thread:$0]  %s54, 256, %s56, [#allocation6], 64, 64, 4
    $region13: #{tpu_custom_call.1} parent=1 // pred_fallthru
      _
    // Predicated region
    $region14: #{tpu_custom_call.1} parent=1 // pred_check
      _
    $region15: #{tpu_custom_call.1} parent=1 // pred_check_branch
      %63 = sbr.rel (0) target = $region17
    $region16: #{tpu_custom_call.1} parent=1 // pred_region
      _
    $region17: #{tpu_custom_call.1} parent=1 // pred_fallthru
      _
    // Predicated region
    $region18: #{tpu_custom_call.1} parent=1 // pred_check
      _
    $region19: #{tpu_custom_call.1} parent=1 // pred_check_branch
      %65 = sbr.rel (0) target = $region21
    $region20: #{tpu_custom_call.1} parent=1 // pred_region
      %67 = vsyncadd [#allocation9], 0
      %s68 = sshll.u32 %s4, 4
      %s69 = int_to_ptr.hbm [resolvable:$true] %s68
      %s70 = sshll.u32 [#allocation8], 4
      %s71 = int_to_ptr.vmem [resolvable:$true] %s70
      %76 = dma.hbm_to_vmem [thread:$0]  %s69, 128, %s71, [#allocation9], 64, 64, 4
    $region21: #{tpu_custom_call.1} parent=1 // pred_fallthru
      _
    // Predicated region
    $region22: #{tpu_custom_call.1} parent=1 // pred_check
      _
    $region23: #{tpu_custom_call.1} parent=1 // pred_check_branch
      %78 = sbr.rel (0) target = $region25
    $region24: #{tpu_custom_call.1} parent=1 // pred_region
      _
    $region25: #{tpu_custom_call.1} parent=1 // pred_fallthru
      _
    // Predicated region
    $region26: #{tpu_custom_call.1} parent=1 // pred_check
      _
    $region27: #{tpu_custom_call.1} parent=1 // pred_check_branch
      %80 = sbr.rel (0) target = $region29
    $region28: #{tpu_custom_call.1} parent=1 // pred_region
      %82 = vsyncadd [#allocation9], 0
      %s83 = sshll.u32 %s6, 4
      %s84 = int_to_ptr.hbm [resolvable:$true] %s83
      %s85 = sshll.u32 [#allocation10], 4
      %s86 = int_to_ptr.vmem [resolvable:$true] %s85
      %91 = dma.hbm_to_vmem [thread:$0]  %s84, 128, %s86, [#allocation9], 64, 64, 4
    $region29: #{tpu_custom_call.1} parent=1 // pred_fallthru
      _
    // Predicated region
    $region30: #{tpu_custom_call.1} parent=1 // pred_check
      _
    $region31: #{tpu_custom_call.1} parent=1 // pred_check_branch
      %93 = sbr.rel (0) target = $region33
    $region32: #{tpu_custom_call.1} parent=1 // pred_region
      _
    $region33: #{tpu_custom_call.1} parent=1 // pred_fallthru
      _
    // Predicated region
    $region34: #{tpu_custom_call.1} parent=1 // pred_check
      _
    $region35: #{tpu_custom_call.1} parent=1 // pred_check_branch
      %95 = sbr.rel (0) target = $region37
    $region36: #{tpu_custom_call.1} parent=1 // pred_region
      %97 = vsyncadd [#allocation12], 0
      %s98 = sshll.u32 %s8, 4
      %s99 = int_to_ptr.hbm [resolvable:$true] %s98
      %s100 = sshll.u32 [#allocation11], 4
      %s101 = int_to_ptr.vmem [resolvable:$true] %s100
      %106 = dma.hbm_to_vmem [thread:$0]  %s99, 256, %s101, [#allocation12], 64, 64, 4
    $region37: #{tpu_custom_call.1} parent=1 // pred_fallthru
      _
    // Predicated region
    $region38: #{tpu_custom_call.1} parent=1 // pred_check
      _
    $region39: #{tpu_custom_call.1} parent=1 // pred_check_branch
      %108 = sbr.rel (0) target = $region41
    $region40: #{tpu_custom_call.1} parent=1 // pred_region
      _
    $region41: #{tpu_custom_call.1} parent=1 // pred_fallthru
      _
    // Predicated region
    $region42: #{tpu_custom_call.1} parent=1 // pred_check
      _
    $region43: #{tpu_custom_call.1} parent=1 // pred_check_branch
      %110 = sbr.rel (0) target = $region45
    $region44: #{tpu_custom_call.1} parent=1 // pred_region
      %112 = dma.done [#allocation3], 128
    $region45: #{tpu_custom_call.1} parent=1 // pred_fallthru
      _
    // Predicated region
    $region46: #{tpu_custom_call.1} parent=1 // pred_check
      _
    $region47: #{tpu_custom_call.1} parent=1 // pred_check_branch
      %114 = sbr.rel (0) target = $region49
    $region48: #{tpu_custom_call.1} parent=1 // pred_region
      %116 = dma.done [#allocation6], 128
    $region49: #{tpu_custom_call.1} parent=1 // pred_fallthru
      _
    // Predicated region
    $region50: #{tpu_custom_call.1} parent=1 // pred_check
      _
    $region51: #{tpu_custom_call.1} parent=1 // pred_check_branch
      %118 = sbr.rel (0) target = $region53
    $region52: #{tpu_custom_call.1} parent=1 // pred_region
      %120 = dma.done [#allocation6], 256
    $region53: #{tpu_custom_call.1} parent=1 // pred_fallthru
      _
    // Predicated region
    $region54: #{tpu_custom_call.1} parent=1 // pred_check
      _
    $region55: #{tpu_custom_call.1} parent=1 // pred_check_branch
      %122 = sbr.rel (0) target = $region57
    $region56: #{tpu_custom_call.1} parent=1 // pred_region
      %124 = dma.done [#allocation9], 128
    $region57: #{tpu_custom_call.1} parent=1 // pred_fallthru
      _
    // Predicated region
    $region58: #{tpu_custom_call.1} parent=1 // pred_check
      _
    $region59: #{tpu_custom_call.1} parent=1 // pred_check_branch
      %126 = sbr.rel (0) target = $region61
    $region60: #{tpu_custom_call.1} parent=1 // pred_region
      %128 = dma.done [#allocation9], 128
    $region61: #{tpu_custom_call.1} parent=1 // pred_fallthru
      _
    // Predicated region
    $region62: #{tpu_custom_call.1} parent=1 // pred_check
      _
    $region63: #{tpu_custom_call.1} parent=1 // pred_check_branch
      %130 = sbr.rel (0) target = $region65
    $region64: #{tpu_custom_call.1} parent=1 // pred_region
      %132 = dma.done [#allocation12], 256
    $region65: #{tpu_custom_call.1} parent=1 // pred_fallthru
      _
    %v134 = vld [vmem:[#allocation2] sm:$0xf]
    %v135 = vld [vmem:[#allocation2 + $0x4] sm:$0xf]
    %v136 = vld [vmem:[#allocation5] sm:$0xf]
    %v137 = vld [vmem:[#allocation5 + $0x4] sm:$0xf]
    %v138 = vld [vmem:[#allocation7] sm:$0xf]
    %v139 = vld [vmem:[#allocation7 + $0x4] sm:$0xf]
    %v140 = vld [vmem:[#allocation7 + $0x8] sm:$0xf]
    %v141 = vld [vmem:[#allocation7 + $0xc] sm:$0xf]
    %v142 = vld [vmem:[%s3] sm:$0x1]
    %v144 = vperm.slane %v142, 0
    %v148 = vunpack.c.l.b16 %v134
    %v149 = vunpack.c.l.b16 %v135
    %v150 = vpack.c.b16 %v149, %v148
    %v155 = vunpack.c.l.b16 %v138
    %v156 = vunpack.c.l.b16 %v139
    %v157 = vunpack.c.l.b16 %v140
    %v158 = vunpack.c.l.b16 %v141
    %v159 = vpack.c.b16 %v156, %v155
    %v160 = vpack.c.b16 %v158, %v157
    %vm163 = vcmask 261120
    %v165 = vsel %vm163, %v150, 0
    %167 = vmatpush.bf16.msra.mxu0 0
    %168 = vmatpush.bf16.msra.mxu0 0
    %169 = vmatpush.bf16.msra.mxu0 0
    %170 = vmatpush.bf16.msra.mxu0 0
    %171 = vmatpush.bf16.msra.mxu0 0
    %172 = vmatpush.bf16.msra.mxu0 0
    %173 = vmatpush.bf16.msra.mxu0 %v160
    %174 = vmatpush.bf16.msra.mxu0 %v159
    %175 = vmatmul.bf16.gmra.mxu0 %v165
    %v176 = vpop.f32.mrf.mxu0
    %v177 = vadd.f32 %v144, %v176
    %v178 = vpop.f32.mrf.mxu0
    %v179 = vadd.f32 %v144, %v178
    %180 = vdwg.mxu0
    %v181 = vld [vmem:[#allocation8] sm:$0xf]
    %v182 = vld [vmem:[#allocation8 + $0x4] sm:$0xf]
    %v183 = vld [vmem:[%s5] sm:$0x1]
    %v185 = vperm.slane %v183, 0
    %v189 = vunpack.c.l.b16 %v136
    %v190 = vunpack.c.l.b16 %v137
    %v191 = vpack.c.b16 %v190, %v189
    %v194 = vunpack.c.l.b16 %v181
    %v195 = vunpack.c.l.b16 %v182
    %v196 = vpack.c.b16 %v195, %v194
    %vm198 = vcmask 130048
    %v200 = vsel %vm198, %v191, 0
    %202 = vmatpush.bf16.msra.mxu0 0
    %203 = vmatpush.bf16.msra.mxu0 0
    %204 = vmatpush.bf16.msra.mxu0 0
    %205 = vmatpush.bf16.msra.mxu0 0
    %206 = vmatpush.bf16.msra.mxu0 0
    %207 = vmatpush.bf16.msra.mxu0 0
    %208 = vmatpush.bf16.msra.mxu0 0
    %209 = vmatpush.bf16.msra.mxu0 %v196
    %210 = vmatmul.bf16.gmra.mxu0 %v200
    %v211 = vpop.f32.mrf.mxu0
    %v212 = vadd.f32 %v185, %v211
    %v213 = vpop.f32.mrf.mxu0
    %v214 = vadd.f32 %v185, %v213
    %215 = vdwg.mxu0
    %v216 = vld [vmem:[#allocation10] sm:$0xf]
    %v217 = vld [vmem:[#allocation10 + $0x4] sm:$0xf]
    %v218 = vld [vmem:[%s7] sm:$0x1]
    %v220 = vperm.slane %v218, 0
    %v224 = vunpack.c.l.b16 %v216
    %v225 = vunpack.c.l.b16 %v217
    %v226 = vpack.c.b16 %v225, %v224
    %228 = vmatpush.bf16.msra.mxu0 0
    %229 = vmatpush.bf16.msra.mxu0 0
    %230 = vmatpush.bf16.msra.mxu0 0
    %231 = vmatpush.bf16.msra.mxu0 0
    %232 = vmatpush.bf16.msra.mxu0 0
    %233 = vmatpush.bf16.msra.mxu0 0
    %234 = vmatpush.bf16.msra.mxu0 0
    %235 = vmatpush.bf16.msra.mxu0 %v226
    %236 = vmatmul.bf16.gmra.mxu0 %v200
    %v237 = vpop.f32.mrf.mxu0
    %v238 = vadd.f32 %v220, %v237
    %v239 = vpop.f32.mrf.mxu0
    %v240 = vadd.f32 %v220, %v239
    %241 = vdwg.mxu0
    %244 = vrot.lane.b32.xlu0 %v177, 120
    %v245 = vpop.permute.xlu0 %244
    %246 = vrot.lane.b32.xlu0 %v179, 120
    %v247 = vpop.permute.xlu0 %246
    %250 = vrot.lane.b32.xlu0 %v177, 112
    %v251 = vpop.permute.xlu0 %250
    %252 = vrot.lane.b32.xlu0 %v179, 112
    %v253 = vpop.permute.xlu0 %252
    %256 = vrot.lane.b32.xlu0 %v177, 104
    %v257 = vpop.permute.xlu0 %256
    %258 = vrot.lane.b32.xlu0 %v179, 104
    %v259 = vpop.permute.xlu0 %258
    %v262 = vpack.c.bf16 %v177, %v177
    %v263 = vpack.c.bf16 %v245, %v245
    %v264 = vpack.c.bf16 %v251, %v251
    %v265 = vpack.c.bf16 %v257, %v257
    %v266 = vpack.c.bf16 %v179, %v179
    %v267 = vpack.c.bf16 %v247, %v247
    %v268 = vpack.c.bf16 %v253, %v253
    %v269 = vpack.c.bf16 %v259, %v259
    %272 = vrot.lane.b32.xlu0 %v212, 120
    %v273 = vpop.permute.xlu0 %272
    %274 = vrot.lane.b32.xlu0 %v214, 120
    %v275 = vpop.permute.xlu0 %274
    %278 = vrot.lane.b32.xlu0 %v212, 112
    %v279 = vpop.permute.xlu0 %278
    %280 = vrot.lane.b32.xlu0 %v214, 112
    %v281 = vpop.permute.xlu0 %280
    %284 = vrot.lane.b32.xlu0 %v212, 104
    %v285 = vpop.permute.xlu0 %284
    %286 = vrot.lane.b32.xlu0 %v214, 104
    %v287 = vpop.permute.xlu0 %286
    %v290 = vpack.c.bf16 %v212, %v212
    %v291 = vpack.c.bf16 %v273, %v273
    %v292 = vpack.c.bf16 %v279, %v279
    %v293 = vpack.c.bf16 %v285, %v285
    %v294 = vpack.c.bf16 %v214, %v214
    %v295 = vpack.c.bf16 %v275, %v275
    %v296 = vpack.c.bf16 %v281, %v281
    %v297 = vpack.c.bf16 %v287, %v287
    %300 = vrot.lane.b32.xlu0 %v238, 120
    %v301 = vpop.permute.xlu0 %300
    %302 = vrot.lane.b32.xlu0 %v240, 120
    %v303 = vpop.permute.xlu0 %302
    %306 = vrot.lane.b32.xlu0 %v238, 112
    %v307 = vpop.permute.xlu0 %306
    %308 = vrot.lane.b32.xlu0 %v240, 112
    %v309 = vpop.permute.xlu0 %308
    %312 = vrot.lane.b32.xlu0 %v238, 104
    %v313 = vpop.permute.xlu0 %312
    %314 = vrot.lane.b32.xlu0 %v240, 104
    %v315 = vpop.permute.xlu0 %314
    %v318 = vpack.c.bf16 %v238, %v238
    %v319 = vpack.c.bf16 %v301, %v301
    %v320 = vpack.c.bf16 %v307, %v307
    %v321 = vpack.c.bf16 %v313, %v313
    %v322 = vpack.c.bf16 %v240, %v240
    %v323 = vpack.c.bf16 %v303, %v303
    %v324 = vpack.c.bf16 %v309, %v309
    %v325 = vpack.c.bf16 %v315, %v315
    %vm326 = vcmask 64512
    %v328 = vsel %vm326, %v262, 0
    %v331 = vsel %vm326, %v290, 0
    %333 = vmatpush.bf16.xpose.msra.mxu0 0
    %334 = vmatpush.bf16.xpose.msra.mxu0 0
    %335 = vmatpush.bf16.xpose.msra.mxu0 0
    %336 = vmatpush.bf16.xpose.msra.mxu0 0
    %337 = vmatpush.bf16.xpose.msra.mxu0 0
    %338 = vmatpush.bf16.xpose.msra.mxu0 0
    %339 = vmatpush.bf16.xpose.msra.mxu0 0
    %340 = vmatpush.bf16.xpose.msra.mxu0 %v331
    %341 = vmatmul.bf16.gmra.mxu0 %v328
    %v342 = vpop.f32.mrf.mxu0
    %v343 = vadd.f32 0.0, %v342
    %v344 = vpop.f32.mrf.mxu0
    %345 = vdwg.mxu0
    %v347 = vsel %vm326, %v263, 0
    %v350 = vsel %vm326, %v291, 0
    %352 = vmatpush.bf16.xpose.msra.mxu0 0
    %353 = vmatpush.bf16.xpose.msra.mxu0 0
    %354 = vmatpush.bf16.xpose.msra.mxu0 0
    %355 = vmatpush.bf16.xpose.msra.mxu0 0
    %356 = vmatpush.bf16.xpose.msra.mxu0 0
    %357 = vmatpush.bf16.xpose.msra.mxu0 0
    %358 = vmatpush.bf16.xpose.msra.mxu0 0
    %359 = vmatpush.bf16.xpose.msra.mxu0 %v350
    %360 = vmatmul.bf16.gmra.mxu0 %v347
    %v361 = vpop.f32.mrf.mxu0
    %v362 = vadd.f32 0.0, %v361
    %v363 = vpop.f32.mrf.mxu0
    %364 = vdwg.mxu0
    %v366 = vsel %vm326, %v264, 0
    %v369 = vsel %vm326, %v292, 0
    %371 = vmatpush.bf16.xpose.msra.mxu0 0
    %372 = vmatpush.bf16.xpose.msra.mxu0 0
    %373 = vmatpush.bf16.xpose.msra.mxu0 0
    %374 = vmatpush.bf16.xpose.msra.mxu0 0
    %375 = vmatpush.bf16.xpose.msra.mxu0 0
    %376 = vmatpush.bf16.xpose.msra.mxu0 0
    %377 = vmatpush.bf16.xpose.msra.mxu0 0
    %378 = vmatpush.bf16.xpose.msra.mxu0 %v369
    %379 = vmatmul.bf16.gmra.mxu0 %v366
    %v380 = vpop.f32.mrf.mxu0
    %v381 = vadd.f32 0.0, %v380
    %v382 = vpop.f32.mrf.mxu0
    %383 = vdwg.mxu0
    %v385 = vsel %vm326, %v265, 0
    %v388 = vsel %vm326, %v293, 0
    %390 = vmatpush.bf16.xpose.msra.mxu0 0
    %391 = vmatpush.bf16.xpose.msra.mxu0 0
    %392 = vmatpush.bf16.xpose.msra.mxu0 0
    %393 = vmatpush.bf16.xpose.msra.mxu0 0
    %394 = vmatpush.bf16.xpose.msra.mxu0 0
    %395 = vmatpush.bf16.xpose.msra.mxu0 0
    %396 = vmatpush.bf16.xpose.msra.mxu0 0
    %397 = vmatpush.bf16.xpose.msra.mxu0 %v388
    %398 = vmatmul.bf16.gmra.mxu0 %v385
    %v399 = vpop.f32.mrf.mxu0
    %v400 = vadd.f32 0.0, %v399
    %v401 = vpop.f32.mrf.mxu0
    %402 = vdwg.mxu0
    %v404 = vsel %vm326, %v266, 0
    %v407 = vsel %vm326, %v294, 0
    %409 = vmatpush.bf16.xpose.msra.mxu0 0
    %410 = vmatpush.bf16.xpose.msra.mxu0 0
    %411 = vmatpush.bf16.xpose.msra.mxu0 0
    %412 = vmatpush.bf16.xpose.msra.mxu0 0
    %413 = vmatpush.bf16.xpose.msra.mxu0 0
    %414 = vmatpush.bf16.xpose.msra.mxu0 0
    %415 = vmatpush.bf16.xpose.msra.mxu0 0
    %416 = vmatpush.bf16.xpose.msra.mxu0 %v407
    %417 = vmatmul.bf16.gmra.mxu0 %v404
    %v418 = vpop.f32.mrf.mxu0
    %v419 = vadd.f32 0.0, %v418
    %v420 = vpop.f32.mrf.mxu0
    %421 = vdwg.mxu0
    %v423 = vsel %vm326, %v267, 0
    %v426 = vsel %vm326, %v295, 0
    %428 = vmatpush.bf16.xpose.msra.mxu0 0
    %429 = vmatpush.bf16.xpose.msra.mxu0 0
    %430 = vmatpush.bf16.xpose.msra.mxu0 0
    %431 = vmatpush.bf16.xpose.msra.mxu0 0
    %432 = vmatpush.bf16.xpose.msra.mxu0 0
    %433 = vmatpush.bf16.xpose.msra.mxu0 0
    %434 = vmatpush.bf16.xpose.msra.mxu0 0
    %435 = vmatpush.bf16.xpose.msra.mxu0 %v426
    %436 = vmatmul.bf16.gmra.mxu0 %v423
    %v437 = vpop.f32.mrf.mxu0
    %v438 = vadd.f32 0.0, %v437
    %v439 = vpop.f32.mrf.mxu0
    %440 = vdwg.mxu0
    %v442 = vsel %vm326, %v268, 0
    %v445 = vsel %vm326, %v296, 0
    %447 = vmatpush.bf16.xpose.msra.mxu0 0
    %448 = vmatpush.bf16.xpose.msra.mxu0 0
    %449 = vmatpush.bf16.xpose.msra.mxu0 0
    %450 = vmatpush.bf16.xpose.msra.mxu0 0
    %451 = vmatpush.bf16.xpose.msra.mxu0 0
    %452 = vmatpush.bf16.xpose.msra.mxu0 0
    %453 = vmatpush.bf16.xpose.msra.mxu0 0
    %454 = vmatpush.bf16.xpose.msra.mxu0 %v445
    %455 = vmatmul.bf16.gmra.mxu0 %v442
    %v456 = vpop.f32.mrf.mxu0
    %v457 = vadd.f32 0.0, %v456
    %v458 = vpop.f32.mrf.mxu0
    %459 = vdwg.mxu0
    %v461 = vsel %vm326, %v269, 0
    %v464 = vsel %vm326, %v297, 0
    %466 = vmatpush.bf16.xpose.msra.mxu0 0
    %467 = vmatpush.bf16.xpose.msra.mxu0 0
    %468 = vmatpush.bf16.xpose.msra.mxu0 0
    %469 = vmatpush.bf16.xpose.msra.mxu0 0
    %470 = vmatpush.bf16.xpose.msra.mxu0 0
    %471 = vmatpush.bf16.xpose.msra.mxu0 0
    %472 = vmatpush.bf16.xpose.msra.mxu0 0
    %473 = vmatpush.bf16.xpose.msra.mxu0 %v464
    %474 = vmatmul.bf16.gmra.mxu0 %v461
    %v475 = vpop.f32.mrf.mxu0
    %v476 = vadd.f32 0.0, %v475
    %v477 = vpop.f32.mrf.mxu0
    %478 = vdwg.mxu0
    %v479 = vmul.f32 %v343, 0.35355338
    %v480 = vmul.f32 %v362, 0.35355338
    %v481 = vmul.f32 %v381, 0.35355338
    %v482 = vmul.f32 %v400, 0.35355338
    %v483 = vmul.f32 %v419, 0.35355338
    %v484 = vmul.f32 %v438, 0.35355338
    %v485 = vmul.f32 %v457, 0.35355338
    %v486 = vmul.f32 %v476, 0.35355338
    %v487 = vsel %vm326, %v479, -inf
    %488 = vmax.xlane.f32.xlu0 %v487
    %v489 = vpop.xlane.xlu0 %488
    %v490 = vsel %vm326, %v480, -inf
    %491 = vmax.xlane.f32.xlu0 %v490
    %v492 = vpop.xlane.xlu0 %491
    %v493 = vsel %vm326, %v481, -inf
    %494 = vmax.xlane.f32.xlu0 %v493
    %v495 = vpop.xlane.xlu0 %494
    %v496 = vsel %vm326, %v482, -inf
    %497 = vmax.xlane.f32.xlu0 %v496
    %v498 = vpop.xlane.xlu0 %497
    %v499 = vsel %vm326, %v483, -inf
    %500 = vmax.xlane.f32.xlu0 %v499
    %v501 = vpop.xlane.xlu0 %500
    %v502 = vsel %vm326, %v484, -inf
    %503 = vmax.xlane.f32.xlu0 %v502
    %v504 = vpop.xlane.xlu0 %503
    %v505 = vsel %vm326, %v485, -inf
    %506 = vmax.xlane.f32.xlu0 %v505
    %v507 = vpop.xlane.xlu0 %506
    %v508 = vsel %vm326, %v486, -inf
    %509 = vmax.xlane.f32.xlu0 %v508
    %v510 = vpop.xlane.xlu0 %509
    %v511 = vsub.f32 %v479, %v489
    %v512 = vsub.f32 %v480, %v492
    %v513 = vsub.f32 %v481, %v495
    %v514 = vsub.f32 %v482, %v498
    %v515 = vsub.f32 %v483, %v501
    %v516 = vsub.f32 %v484, %v504
    %v517 = vsub.f32 %v485, %v507
    %v518 = vsub.f32 %v486, %v510
    %v519 = vmul.f32 %v511, 1.442695
    %v520 = vpow.pop %v519
    %v521 = vmul.f32 %v512, 1.442695
    %v522 = vpow.pop %v521
    %v523 = vmul.f32 %v513, 1.442695
    %v524 = vpow.pop %v523
    %v525 = vmul.f32 %v514, 1.442695
    %v526 = vpow.pop %v525
    %v527 = vmul.f32 %v515, 1.442695
    %v528 = vpow.pop %v527
    %v529 = vmul.f32 %v516, 1.442695
    %v530 = vpow.pop %v529
    %v531 = vmul.f32 %v517, 1.442695
    %v532 = vpow.pop %v531
    %v533 = vmul.f32 %v518, 1.442695
    %v534 = vpow.pop %v533
    %v535 = vsel %vm326, %v520, 0.0
    %536 = vadd.xlane.f32.xlu0 %v535
    %v537 = vpop.xlane.xlu0 %536
    %v538 = vsel %vm326, %v522, 0.0
    %539 = vadd.xlane.f32.xlu0 %v538
    %v540 = vpop.xlane.xlu0 %539
    %v541 = vsel %vm326, %v524, 0.0
    %542 = vadd.xlane.f32.xlu0 %v541
    %v543 = vpop.xlane.xlu0 %542
    %v544 = vsel %vm326, %v526, 0.0
    %545 = vadd.xlane.f32.xlu0 %v544
    %v546 = vpop.xlane.xlu0 %545
    %v547 = vsel %vm326, %v528, 0.0
    %548 = vadd.xlane.f32.xlu0 %v547
    %v549 = vpop.xlane.xlu0 %548
    %v550 = vsel %vm326, %v530, 0.0
    %551 = vadd.xlane.f32.xlu0 %v550
    %v552 = vpop.xlane.xlu0 %551
    %v553 = vsel %vm326, %v532, 0.0
    %554 = vadd.xlane.f32.xlu0 %v553
    %v555 = vpop.xlane.xlu0 %554
    %v556 = vsel %vm326, %v534, 0.0
    %557 = vadd.xlane.f32.xlu0 %v556
    %v558 = vpop.xlane.xlu0 %557
    %v559 = vrcp.pop %v537
    %v560 = vrcp.pop %v540
    %v561 = vrcp.pop %v543
    %v562 = vrcp.pop %v546
    %v563 = vrcp.pop %v549
    %v564 = vrcp.pop %v552
    %v565 = vrcp.pop %v555
    %v566 = vrcp.pop %v558
    %v567 = vmul.f32 %v520, %v559
    %v568 = vmul.f32 %v522, %v560
    %v569 = vmul.f32 %v524, %v561
    %v570 = vmul.f32 %v526, %v562
    %v571 = vmul.f32 %v528, %v563
    %v572 = vmul.f32 %v530, %v564
    %v573 = vmul.f32 %v532, %v565
    %v574 = vmul.f32 %v534, %v566
    %v575 = vpack.c.bf16 %v567, %v567
    %v576 = vpack.c.bf16 %v568, %v568
    %v577 = vpack.c.bf16 %v569, %v569
    %v578 = vpack.c.bf16 %v570, %v570
    %v579 = vpack.c.bf16 %v571, %v571
    %v580 = vpack.c.bf16 %v572, %v572
    %v581 = vpack.c.bf16 %v573, %v573
    %v582 = vpack.c.bf16 %v574, %v574
    %v584 = vsel %vm326, %v575, 0
    %vm586 = vcmask 1043456
    %v588 = vsel %vm586, %v318, 0
    %590 = vmatpush.bf16.msra.mxu0 0
    %591 = vmatpush.bf16.msra.mxu0 0
    %592 = vmatpush.bf16.msra.mxu0 0
    %593 = vmatpush.bf16.msra.mxu0 0
    %594 = vmatpush.bf16.msra.mxu0 0
    %595 = vmatpush.bf16.msra.mxu0 0
    %596 = vmatpush.bf16.msra.mxu0 0
    %597 = vmatpush.bf16.msra.mxu0 %v588
    %598 = vmatmul.bf16.gmra.mxu0 %v584
    %v599 = vpop.f32.mrf.mxu0
    %v600 = vadd.f32 0.0, %v599
    %v601 = vpop.f32.mrf.mxu0
    %602 = vdwg.mxu0
    %v604 = vsel %vm326, %v576, 0
    %v607 = vsel %vm586, %v319, 0
    %609 = vmatpush.bf16.msra.mxu0 0
    %610 = vmatpush.bf16.msra.mxu0 0
    %611 = vmatpush.bf16.msra.mxu0 0
    %612 = vmatpush.bf16.msra.mxu0 0
    %613 = vmatpush.bf16.msra.mxu0 0
    %614 = vmatpush.bf16.msra.mxu0 0
    %615 = vmatpush.bf16.msra.mxu0 0
    %616 = vmatpush.bf16.msra.mxu0 %v607
    %617 = vmatmul.bf16.gmra.mxu0 %v604
    %v618 = vpop.f32.mrf.mxu0
    %v619 = vadd.f32 0.0, %v618
    %v620 = vpop.f32.mrf.mxu0
    %621 = vdwg.mxu0
    %v623 = vsel %vm326, %v577, 0
    %v626 = vsel %vm586, %v320, 0
    %628 = vmatpush.bf16.msra.mxu0 0
    %629 = vmatpush.bf16.msra.mxu0 0
    %630 = vmatpush.bf16.msra.mxu0 0
    %631 = vmatpush.bf16.msra.mxu0 0
    %632 = vmatpush.bf16.msra.mxu0 0
    %633 = vmatpush.bf16.msra.mxu0 0
    %634 = vmatpush.bf16.msra.mxu0 0
    %635 = vmatpush.bf16.msra.mxu0 %v626
    %636 = vmatmul.bf16.gmra.mxu0 %v623
    %v637 = vpop.f32.mrf.mxu0
    %v638 = vadd.f32 0.0, %v637
    %v639 = vpop.f32.mrf.mxu0
    %640 = vdwg.mxu0
    %v642 = vsel %vm326, %v578, 0
    %v645 = vsel %vm586, %v321, 0
    %647 = vmatpush.bf16.msra.mxu0 0
    %648 = vmatpush.bf16.msra.mxu0 0
    %649 = vmatpush.bf16.msra.mxu0 0
    %650 = vmatpush.bf16.msra.mxu0 0
    %651 = vmatpush.bf16.msra.mxu0 0
    %652 = vmatpush.bf16.msra.mxu0 0
    %653 = vmatpush.bf16.msra.mxu0 0
    %654 = vmatpush.bf16.msra.mxu0 %v645
    %655 = vmatmul.bf16.gmra.mxu0 %v642
    %v656 = vpop.f32.mrf.mxu0
    %v657 = vadd.f32 0.0, %v656
    %v658 = vpop.f32.mrf.mxu0
    %659 = vdwg.mxu0
    %v661 = vsel %vm326, %v579, 0
    %v664 = vsel %vm586, %v322, 0
    %666 = vmatpush.bf16.msra.mxu0 0
    %667 = vmatpush.bf16.msra.mxu0 0
    %668 = vmatpush.bf16.msra.mxu0 0
    %669 = vmatpush.bf16.msra.mxu0 0
    %670 = vmatpush.bf16.msra.mxu0 0
    %671 = vmatpush.bf16.msra.mxu0 0
    %672 = vmatpush.bf16.msra.mxu0 0
    %673 = vmatpush.bf16.msra.mxu0 %v664
    %674 = vmatmul.bf16.gmra.mxu0 %v661
    %v675 = vpop.f32.mrf.mxu0
    %v676 = vadd.f32 0.0, %v675
    %v677 = vpop.f32.mrf.mxu0
    %678 = vdwg.mxu0
    %v680 = vsel %vm326, %v580, 0
    %v683 = vsel %vm586, %v323, 0
    %685 = vmatpush.bf16.msra.mxu0 0
    %686 = vmatpush.bf16.msra.mxu0 0
    %687 = vmatpush.bf16.msra.mxu0 0
    %688 = vmatpush.bf16.msra.mxu0 0
    %689 = vmatpush.bf16.msra.mxu0 0
    %690 = vmatpush.bf16.msra.mxu0 0
    %691 = vmatpush.bf16.msra.mxu0 0
    %692 = vmatpush.bf16.msra.mxu0 %v683
    %693 = vmatmul.bf16.gmra.mxu0 %v680
    %v694 = vpop.f32.mrf.mxu0
    %v695 = vadd.f32 0.0, %v694
    %v696 = vpop.f32.mrf.mxu0
    %697 = vdwg.mxu0
    %v699 = vsel %vm326, %v581, 0
    %v702 = vsel %vm586, %v324, 0
    %704 = vmatpush.bf16.msra.mxu0 0
    %705 = vmatpush.bf16.msra.mxu0 0
    %706 = vmatpush.bf16.msra.mxu0 0
    %707 = vmatpush.bf16.msra.mxu0 0
    %708 = vmatpush.bf16.msra.mxu0 0
    %709 = vmatpush.bf16.msra.mxu0 0
    %710 = vmatpush.bf16.msra.mxu0 0
    %711 = vmatpush.bf16.msra.mxu0 %v702
    %712 = vmatmul.bf16.gmra.mxu0 %v699
    %v713 = vpop.f32.mrf.mxu0
    %v714 = vadd.f32 0.0, %v713
    %v715 = vpop.f32.mrf.mxu0
    %716 = vdwg.mxu0
    %v718 = vsel %vm326, %v582, 0
    %v721 = vsel %vm586, %v325, 0
    %723 = vmatpush.bf16.msra.mxu0 0
    %724 = vmatpush.bf16.msra.mxu0 0
    %725 = vmatpush.bf16.msra.mxu0 0
    %726 = vmatpush.bf16.msra.mxu0 0
    %727 = vmatpush.bf16.msra.mxu0 0
    %728 = vmatpush.bf16.msra.mxu0 0
    %729 = vmatpush.bf16.msra.mxu0 0
    %730 = vmatpush.bf16.msra.mxu0 %v721
    %731 = vmatmul.bf16.gmra.mxu0 %v718
    %v732 = vpop.f32.mrf.mxu0
    %v733 = vadd.f32 0.0, %v732
    %v734 = vpop.f32.mrf.mxu0
    %735 = vdwg.mxu0
    %738 = vrot.lane.b32.xlu0 %v619, 8
    %v739 = vpop.permute.xlu0 %738
    %740 = vrot.lane.b32.xlu0 %v695, 8
    %v741 = vpop.permute.xlu0 %740
    %746 = vrot.lane.b32.xlu0 %v638, 16
    %v747 = vpop.permute.xlu0 %746
    %748 = vrot.lane.b32.xlu0 %v714, 16
    %v749 = vpop.permute.xlu0 %748
    %754 = vrot.lane.b32.xlu0 %v657, 24
    %v755 = vpop.permute.xlu0 %754
    %756 = vrot.lane.b32.xlu0 %v733, 24
    %v757 = vpop.permute.xlu0 %756
    %v760 = vsel %vm326, %v600, %v739
    %v761 = vsel %vm326, %v676, %v741
    %v762 = vsel %vm198, %v760, %v747
    %v763 = vsel %vm198, %v761, %v749
    %vm764 = vcmask 195584
    %v765 = vsel %vm764, %v762, %v755
    %v766 = vsel %vm764, %v763, %v757
    %v767 = vpack.c.bf16 %v766, %v765
    %v768 = vld [vmem:[#allocation11] sm:$0xf]
    %v769 = vld [vmem:[#allocation11 + $0x4] sm:$0xf]
    %v770 = vld [vmem:[#allocation11 + $0x8] sm:$0xf]
    %v771 = vld [vmem:[#allocation11 + $0xc] sm:$0xf]
    %v772 = vld [vmem:[%s9] sm:$0x1]
    %v774 = vperm.slane %v772, 0
    %v780 = vunpack.c.l.b16 %v768
    %v781 = vunpack.c.l.b16 %v769
    %v782 = vunpack.c.l.b16 %v770
    %v783 = vunpack.c.l.b16 %v771
    %v784 = vpack.c.b16 %v781, %v780
    %v785 = vpack.c.b16 %v783, %v782
    %v789 = vsel %vm163, %v767, 0
    %791 = vmatpush.bf16.msra.mxu0 0
    %792 = vmatpush.bf16.msra.mxu0 0
    %793 = vmatpush.bf16.msra.mxu0 0
    %794 = vmatpush.bf16.msra.mxu0 0
    %795 = vmatpush.bf16.msra.mxu0 0
    %796 = vmatpush.bf16.msra.mxu0 0
    %797 = vmatpush.bf16.msra.mxu0 %v785
    %798 = vmatpush.bf16.msra.mxu0 %v784
    %799 = vmatmul.bf16.gmra.mxu0 %v789
    %v800 = vpop.f32.mrf.mxu0
    %v801 = vadd.f32 %v774, %v800
    %v802 = vpop.f32.mrf.mxu0
    %v803 = vadd.f32 %v774, %v802
    %804 = vdwg.mxu0
    %v805 = vsel %vm326, %v567, 0.0
    %v806 = vsel %vm326, %v568, 0.0
    %v807 = vadd.f32 %v805, %v806
    %v808 = vsel %vm326, %v569, 0.0
    %v809 = vadd.f32 %v807, %v808
    %v810 = vsel %vm326, %v570, 0.0
    %v811 = vadd.f32 %v809, %v810
    %v812 = vsel %vm326, %v571, 0.0
    %v813 = vsel %vm326, %v572, 0.0
    %v814 = vadd.f32 %v812, %v813
    %v815 = vsel %vm326, %v573, 0.0
    %v816 = vadd.f32 %v814, %v815
    %v817 = vsel %vm326, %v574, 0.0
    %v818 = vadd.f32 %v816, %v817
    %v819 = vrcp.pop 4.0
    %v820 = vmul.f32 4.0, %v819
    %v821 = vsub.f32 1.0, %v820
    %v822 = vmul.f32 %v819, %v821
    %v823 = vadd.f32 %v819, %v822
    %vm824 = vweird.f32 %v819
    %v825 = vsel %vm824, %v819, %v823
    %v826 = vmul.f32 %v811, %v825
    %v827 = vmul.f32 %v818, %v825
    %v829 = vrot.slane %v801, 4
    %830 = vrot.lane.b32.xlu0 %v829, 32
    %v831 = vpop.permute.xlu0 %830
    %834 = vrot.lane.b32.xlu0 %v803, 64
    %v835 = vpop.permute.xlu0 %834
    %v837 = vrot.slane %v803, 4
    %838 = vrot.lane.b32.xlu0 %v837, 96
    %v839 = vpop.permute.xlu0 %838
    %v841 = vsel %vm163, %v801, %v831
    %vm842 = vcmask 523264
    %v843 = vsel %vm842, %v841, %v835
    %vm844 = vcmask 785408
    %v845 = vsel %vm844, %v843, %v839
    %846 = vst [vmem:[#allocation13] sm:$0xf] %v845
    %v848 = vrot.slane %v826, 1
    %849 = vrot.lane.b32.xlu0 %v848, 8
    %v850 = vpop.permute.xlu0 %849
    %v852 = vrot.slane %v826, 2
    %853 = vrot.lane.b32.xlu0 %v852, 16
    %v854 = vpop.permute.xlu0 %853
    %v856 = vrot.slane %v826, 3
    %857 = vrot.lane.b32.xlu0 %v856, 24
    %v858 = vpop.permute.xlu0 %857
    %v860 = vrot.slane %v826, 4
    %861 = vrot.lane.b32.xlu0 %v860, 32
    %v862 = vpop.permute.xlu0 %861
    %v864 = vrot.slane %v826, 5
    %865 = vrot.lane.b32.xlu0 %v864, 40
    %v866 = vpop.permute.xlu0 %865
    %v868 = vrot.slane %v826, 6
    %869 = vrot.lane.b32.xlu0 %v868, 48
    %v870 = vpop.permute.xlu0 %869
    %v872 = vrot.slane %v826, 7
    %873 = vrot.lane.b32.xlu0 %v872, 56
    %v874 = vpop.permute.xlu0 %873
    %877 = vrot.lane.b32.xlu0 %v827, 64
    %v878 = vpop.permute.xlu0 %877
    %v880 = vrot.slane %v827, 1
    %881 = vrot.lane.b32.xlu0 %v880, 72
    %v882 = vpop.permute.xlu0 %881
    %v884 = vrot.slane %v827, 2
    %885 = vrot.lane.b32.xlu0 %v884, 80
    %v886 = vpop.permute.xlu0 %885
    %v888 = vrot.slane %v827, 3
    %889 = vrot.lane.b32.xlu0 %v888, 88
    %v890 = vpop.permute.xlu0 %889
    %v892 = vrot.slane %v827, 4
    %893 = vrot.lane.b32.xlu0 %v892, 96
    %v894 = vpop.permute.xlu0 %893
    %v896 = vrot.slane %v827, 5
    %897 = vrot.lane.b32.xlu0 %v896, 104
    %v898 = vpop.permute.xlu0 %897
    %v900 = vrot.slane %v827, 6
    %901 = vrot.lane.b32.xlu0 %v900, 112
    %v902 = vpop.permute.xlu0 %901
    %v904 = vrot.slane %v827, 7
    %905 = vrot.lane.b32.xlu0 %v904, 120
    %v906 = vpop.permute.xlu0 %905
    %v908 = vsel %vm326, %v826, %v850
    %v909 = vsel %vm198, %v908, %v854
    %v910 = vsel %vm764, %v909, %v858
    %v911 = vsel %vm163, %v910, %v862
    %vm912 = vcmask 326656
    %v913 = vsel %vm912, %v911, %v866
    %vm914 = vcmask 392192
    %v915 = vsel %vm914, %v913, %v870
    %vm916 = vcmask 457728
    %v917 = vsel %vm916, %v915, %v874
    %v918 = vsel %vm842, %v917, %v878
    %vm919 = vcmask 588800
    %v920 = vsel %vm919, %v918, %v882
    %vm921 = vcmask 654336
    %v922 = vsel %vm921, %v920, %v886
    %vm923 = vcmask 719872
    %v924 = vsel %vm923, %v922, %v890
    %v925 = vsel %vm844, %v924, %v894
    %vm926 = vcmask 850944
    %v927 = vsel %vm926, %v925, %v898
    %vm928 = vcmask 916480
    %v929 = vsel %vm928, %v927, %v902
    %vm930 = vcmask 982016
    %v931 = vsel %vm930, %v929, %v906
    %932 = vst [vmem:[#allocation14] sm:$0x1] %v931
    // Predicated region
    $region66: #{tpu_custom_call.1} parent=1 // pred_check
      _
    $region67: #{tpu_custom_call.1} parent=1 // pred_check_branch
      %934 = sbr.rel (0) target = $region69
    $region68: #{tpu_custom_call.1} parent=1 // pred_region
      %936 = vsyncadd [#allocation4], 0
      %s938 = sshll.u32 [#allocation13], 4
      %s939 = int_to_ptr.vmem [resolvable:$true] %s938
      %s940 = sshll.u32 %s10, 4
      %s941 = int_to_ptr.hbm [resolvable:$true] %s940
      %943 = dma.vmem_to_hbm [thread:$0]  %s939, 64, %s941, [#allocation4]
    $region69: #{tpu_custom_call.1} parent=1 // pred_fallthru
      _
    // Predicated region
    $region70: #{tpu_custom_call.1} parent=1 // pred_check
      _
    $region71: #{tpu_custom_call.1} parent=1 // pred_check_branch
      %945 = sbr.rel (0) target = $region73
    $region72: #{tpu_custom_call.1} parent=1 // pred_region
      %947 = vsyncadd [#allocation15], 0
      %s949 = sshll.u32 [#allocation14], 4
      %s950 = int_to_ptr.vmem [resolvable:$true] %s949
      %s951 = sshll.u32 %s11, 4
      %s952 = int_to_ptr.hbm [resolvable:$true] %s951
      %954 = dma.vmem_to_hbm [thread:$0]  %s950, 16, %s952, [#allocation15]
    $region73: #{tpu_custom_call.1} parent=1 // pred_fallthru
      _
    // Predicated region
    $region74: #{tpu_custom_call.1} parent=1 // pred_check
      _
    $region75: #{tpu_custom_call.1} parent=1 // pred_check_branch
      %956 = sbr.rel (0) target = $region77
    $region76: #{tpu_custom_call.1} parent=1 // pred_region
      %958 = dma.done [#allocation4], 64
    $region77: #{tpu_custom_call.1} parent=1 // pred_fallthru
      _
    // Predicated region
    $region78: #{tpu_custom_call.1} parent=1 // pred_check
      _
    $region79: #{tpu_custom_call.1} parent=1 // pred_check_branch
      %960 = sbr.rel (0) target = $region81
    $region80: #{tpu_custom_call.1} parent=1 // pred_region
      %962 = dma.done [#allocation15], 16
    $region81: #{tpu_custom_call.1} parent=1 // pred_fallthru
      _
    %963 = vsyncpa [#allocation3], 1
    %964 = vsyncpa [#allocation6], 1
    %965 = vsyncpa [#allocation9], 1
    %966 = vsyncpa [#allocation12], 1
    %967 = vsyncpa [#allocation4], 1
    %968 = vsyncpa [#allocation15], 1

</llo_original>
